<compile_context>
chip_gen: v7x
topology: tpu7x:2x2x1
jax: 0.10.0
libtpu: 0.0.40
codegen_flags: <defaults>
</compile_context>

<pallas_src>
import functools
import math

import jax
import jax.numpy as jnp
from jax.experimental import pallas as pl
from jax.experimental.pallas import tpu as pltpu


def _round_up(x, m):
    return (x + m - 1) // m * m


# ---------------------------------------------------------------------------
# Kernel (transposed layout: features on sublanes, batch on lanes)
# ---------------------------------------------------------------------------
def _ann_kernel(meta, x_ref, w0_ref, b_ref, wpack_ref, out_ref):
    """x_ref   : (in_dim, tile_n) f32  — feature-major input tile
       w0_ref  : (2*w0, in_dim)  f32   — layer-0 fused [W | W@Wr1]^T, norm folded
       b_ref   : (B, 1)          f32   — packed biases (8-aligned offsets)
       wpack_ref: (R, Cmax)      bf16  — packed MXU weights (16-aligned rows)
       out_ref : (1, tile_n)     f32   — lane-dense output block
    """
    widths = meta["widths"]
    in_dim = meta["in_dim"]
    layer_meta = meta["layer_meta"]
    cmax = meta["wpack_cols"]

    def bias(off, rows):
        return b_ref[pl.ds(off, rows), :]                        # (rows, 1) f32

    def weight(seg, load_rows=None):
        off, rows, cols = seg
        r = rows if load_rows is None else load_rows
        wmat = wpack_ref[pl.ds(off, r), :]                       # bf16
        if cols != cmax:
            wmat = wmat[:, :cols]
        return wmat

    x = x_ref[...]                                               # (in_dim, tile_n) f32
    H = None
    for li, w in enumerate(widths):
        off_cat, off_r2, cat_seg, r2_seg = layer_meta[li]
        bcat = bias(off_cat, 2 * w)                              # (2w, 1)
        if li == 0:
            # Layer 0: K = in_dim is tiny -> rank-k update on the VPU (an MXU dot
            # would use <2% of the array).  Exact f32 (normalization is folded in).
            w0 = w0_ref[...]                                     # (2w, in_dim) f32
            if in_dim <= 8:
                G = w0[:, 0:1] * x[0:1, :]
                for k in range(1, in_dim):
                    G = G + w0[:, k:k + 1] * x[k:k + 1, :]
                G = G + bcat
            else:
                G = jnp.dot(w0, x, preferred_element_type=jnp.float32) + bcat
        else:
            # bf16 MXU operands, f32 accumulation (single-pass MXU).
            WcatT = weight(cat_seg)                              # (2w, w_prev) bf16
            G = jnp.dot(WcatT, H.astype(jnp.bfloat16),
                        preferred_element_type=jnp.float32) + bcat
        Z = G[:w, :]                                             # hidden Linear output
        Rin = G[w:, :]                                           # residual Lin1 output
        Wr2T = weight(r2_seg)                                    # (w, w) bf16
        R = jnp.dot(Wr2T, jnp.maximum(Rin, 0.0).astype(jnp.bfloat16),
                    preferred_element_type=jnp.float32) + bias(off_r2, w)
        H = jnp.tanh(Z + R)                                      # (w, tile_n) f32

    # Output head (default activation='tanh' branch of ANN.forward).
    # TODO(synk): only the default activation='tanh' output head is implemented.
    o_off, o_rows, o_cols = meta["out_seg"]
    WoT = weight(meta["out_seg"], load_rows=_round_up(o_rows, 8))  # zero-padded rows
    Y = jnp.dot(WoT, H.astype(jnp.bfloat16),
                preferred_element_type=jnp.float32)[:o_rows, :]
    Y = Y + bias(meta["out_bias_off"], o_rows)
    # 0.5*(tanh(Y)+1) is already in [0,1]; the module's final clamp is a no-op.
    out_ref[...] = 0.5 * (jnp.tanh(Y) + 1.0)


# ---------------------------------------------------------------------------
# Trace-time parameter preparation (fold + fuse + transpose + pack)
# ---------------------------------------------------------------------------
def prepare_kernel_params(lb, ub, params):
    """params: flat list [W0,b0,Wr1_0,br1_0,Wr2_0,br2_0, ..., Wo,bo]; weights
    stored (in, out), biases (1, out).  Returns (meta, w0T_f32, bias_all_f32,
    wpack_bf16)."""
    num_hidden = (len(params) - 2) // 6
    assert num_hidden >= 1, "ANN with no hidden layers is not supported by this kernel"
    in_dim = lb.shape[1]
    f32 = jnp.float32

    bias_cols, wpack_blocks = [], []
    b_off = 0
    w_off = 0

    def add_bias(col):                       # col: (rows, 1) f32
        nonlocal b_off
        rows = col.shape[0]
        pad = _round_up(rows, 8) - rows
        if pad:
            col = jnp.concatenate([col, jnp.zeros((pad, 1), f32)], axis=0)
        off = b_off
        bias_cols.append(col)
        b_off += col.shape[0]
        return off

    def add_weight(mat):                     # mat: (rows, cols) f32 -> (off, rows, cols)
        nonlocal w_off
        rows, cols = mat.shape
        off = w_off
        wpack_blocks.append((off, mat))
        w_off += _round_up(rows, 16)         # 16-aligned segments (bf16 sublane pack)
        return (off, rows, cols)

    with jax.default_matmul_precision("highest"):    # exact f32 trace-time algebra
        s = 1.0 / (ub - lb)                           # (1, in_dim)
        shift = lb * s                                # (1, in_dim)

        widths, layer_meta = [], []
        w0T = None
        idx = 0
        for layer in range(num_hidden):
            W, b, Wr1, br1, Wr2, br2 = params[idx:idx + 6]
            idx += 6
            if layer == 0:
                b = b - shift @ W                     # fold (x - lb)/(ub - lb)
                W = W * jnp.transpose(s)
            w_out = W.shape[1]
            widths.append(w_out)
            Wcat = jnp.concatenate([W, W @ Wr1], axis=1)            # (in, 2w)
            bcat = jnp.concatenate([b, b @ Wr1 + br1], axis=1)      # (1, 2w)
            off_cat = add_bias(jnp.transpose(bcat).astype(f32))
            off_r2 = add_bias(jnp.transpose(br2).astype(f32))
            r2_seg = add_weight(jnp.transpose(Wr2))                 # (w, w)
            if layer == 0:
                w0T = jnp.transpose(Wcat).astype(f32)               # (2w, in_dim) stays f32
                cat_seg = None
            else:
                cat_seg = add_weight(jnp.transpose(Wcat))           # (2w, w_prev)
            layer_meta.append((off_cat, off_r2, cat_seg, r2_seg))

        Wo, bo = params[idx], params[idx + 1]
        out_bias_off = add_bias(jnp.transpose(bo).astype(f32))
        out_seg = add_weight(jnp.transpose(Wo))                     # (1, w_last)

        bias_all = jnp.concatenate(bias_cols, axis=0)               # (B, 1) f32

        cmax = max(m.shape[1] for _, m in wpack_blocks)
        wpack = jnp.zeros((w_off, cmax), f32)
        for off, m in wpack_blocks:
            wpack = wpack.at[off:off + m.shape[0], :m.shape[1]].set(m)
        wpack = wpack.astype(jnp.bfloat16)   # pre-cast MXU operands once (fusion was f32)

    meta = dict(widths=tuple(widths), layer_meta=tuple(layer_meta),
                out_bias_off=out_bias_off, out_seg=out_seg,
                in_dim=in_dim, wpack_cols=cmax)
    return meta, w0T, bias_all, wpack


# ---------------------------------------------------------------------------
# Tile selection (generation-aware) and wrappers
# ---------------------------------------------------------------------------
def _num_tensorcores():
    """Best-effort TensorCores-per-chip probe (v7x has 2; v5e/v6e have 1)."""
    try:
        dev = jax.devices()[0]
        kind = (getattr(dev, "device_kind", "") or "").lower()
        if "v7" in kind:
            return 2
        n = getattr(dev, "num_cores", None)
        if n in (1, 2):
            return int(n)
    except Exception:
        pass
    return 1


def _pick_tile_n(N, widths, in_dim, *, num_cores=None, vmem_budget_bytes=20 << 20):
    """Largest lane tile that divides N and fits the VMEM budget.  On single-core
    chips (v5e/v6e) take the single biggest tile (each extra grid step only adds
    ~0.35us overhead); on multi-core chips prefer step counts that load-balance
    across TensorCores."""
    if num_cores is None:
        num_cores = _num_tensorcores()
    max_w = max(widths)
    per_lane = 4 * (2 * in_dim + 6 * max_w + 16)     # rough live f32 bytes per batch lane
    cap = max(128, (vmem_budget_bytes // per_lane) // 128 * 128)
    best = None
    for t in (32768, 16384, 8192, 4096, 2048, 1024, 512, 256, 128):
        if t > cap or N % t:
            continue
        if best is None:
            best = t                                  # largest VMEM-safe divisor
        steps = N // t
        if num_cores > 1 and (steps < num_cores or steps % num_cores):
            continue
        return t
    return best if best is not None else N


def ann_forward_pallas_fm(x_fm, lb, ub, params, *, tile_n=None):
    """Feature-major fast path: x_fm is (in_dim, N) f32; returns (1, N) f32.
    No wrapper-side transpose/reshape dispatches."""
    in_dim, N = x_fm.shape
    assert in_dim == lb.shape[1] == ub.shape[1]
    meta, w0T, bias_all, wpack = prepare_kernel_params(lb, ub, params)
    if tile_n is None:
        tile_n = _pick_tile_n(N, meta["widths"], in_dim)
    assert N % tile_n == 0 and tile_n % 128 == 0, \
        "pad N to a multiple of 128 for lane-dense tiles"

    full = lambda a: pl.BlockSpec(a.shape, lambda i: (0,) * a.ndim)
    kernel = functools.partial(_ann_kernel, meta)
    return pl.pallas_call(
        kernel,
        out_shape=jax.ShapeDtypeStruct((1, N), jnp.float32),
        grid_spec=pltpu.PrefetchScalarGridSpec(
            num_scalar_prefetch=0,
            grid=(N // tile_n,),
            in_specs=[pl.BlockSpec((in_dim, tile_n), lambda i: (0, i)),
                      full(w0T), full(bias_all), full(wpack)],
            out_specs=pl.BlockSpec((1, tile_n), lambda i: (0, i)),
        ),
        compiler_params=pltpu.CompilerParams(
            dimension_semantics=("parallel",),
            vmem_limit_bytes=32 * 1024 * 1024),
    )(x_fm, w0T, bias_all, wpack)


def ann_forward_pallas(x, lb, ub, params, *, tile_n=None):
    """Drop-in (N, in_dim) -> (N, 1) wrapper matching ANN.forward.  Prefer
    ann_forward_pallas_fm to avoid the extra transpose dispatch."""
    y = ann_forward_pallas_fm(jnp.transpose(x), lb, ub, params, tile_n=tile_n)
    return jnp.transpose(y)


# ---------------- parameter construction (deterministic, Xavier uniform) ----------------
def xavier_uniform(key, fan_in, fan_out):
    limit = math.sqrt(6.0 / (fan_in + fan_out))
    return jax.random.uniform(key, (fan_in, fan_out), jnp.float32, -limit, limit)


def build_params(key, input_dim, hidden_layers):
    """Matches ANN.__init__: a Linear per transition plus a ResidualBlock (two
    Linears) after each non-final Linear; biases zero (xavier_initialization)."""
    layers = [input_dim] + list(hidden_layers) + [1]
    params = []
    for i in range(len(layers) - 1):
        fi, fo = layers[i], layers[i + 1]
        key, k = jax.random.split(key)
        params.append(xavier_uniform(k, fi, fo))             # W_i (in, out)
        params.append(jnp.zeros((1, fo), jnp.float32))        # b_i
        if i < len(layers) - 2:
            key, k1 = jax.random.split(key)
            key, k2 = jax.random.split(key)
            params.append(xavier_uniform(k1, fo, fo))          # residual Lin1 W
            params.append(jnp.zeros((1, fo), jnp.float32))     # residual Lin1 b
            params.append(xavier_uniform(k2, fo, fo))          # residual Lin2 W
            params.append(jnp.zeros((1, fo), jnp.float32))     # residual Lin2 b
    return params


# ---------------- pure-JAX references for verification ----------------
def ann_forward_ref(x, lb, ub, params):
    """Original (unfused, unfolded, f32) ANN.forward."""
    num_hidden = (len(params) - 2) // 6
    H = (x - lb) / (ub - lb)
    idx = 0
    for _ in range(num_hidden):
        W, b, Wr1, br1, Wr2, br2 = params[idx:idx + 6]
        idx += 6
        H = H @ W + b
        R = jnp.maximum(H @ Wr1 + br1, 0.0) @ Wr2 + br2
        H = jnp.tanh(H + R)
    Y = H @ params[idx] + params[idx + 1]
    Y = 0.5 * (jnp.tanh(Y) + 1.0)
    return jnp.clip(Y, 0.0, 1.0)


def ann_forward_fused_ref_fm(x_fm, meta, w0T, bias_all, wpack):
    """Plain-JAX mirror of the kernel (same fused/folded params, same bf16 dots)."""
    widths = meta["widths"]
    H = None
    for li, w in enumerate(widths):
        off_cat, off_r2, cat_seg, r2_seg = meta["layer_meta"][li]
        bcat = bias_all[off_cat:off_cat + 2 * w, :]
        if li == 0:
            G = w0T @ x_fm + bcat
        else:
            o, r, c = cat_seg
            G = jnp.dot(wpack[o:o + r, :c], H.astype(jnp.bfloat16),
                        preferred_element_type=jnp.float32) + bcat
        o, r, c = r2_seg
        R = jnp.dot(wpack[o:o + r, :c],
                    jnp.maximum(G[w:, :], 0.0).astype(jnp.bfloat16),
                    preferred_element_type=jnp.float32) + bias_all[off_r2:off_r2 + w, :]
        H = jnp.tanh(G[:w, :] + R)
    o, r, c = meta["out_seg"]
    Y = jnp.dot(wpack[o:o + r, :c], H.astype(jnp.bfloat16),
                preferred_element_type=jnp.float32)
    Y = Y + bias_all[meta["out_bias_off"]:meta["out_bias_off"] + r, :]
    return 0.5 * (jnp.tanh(Y) + 1.0)


if __name__ == "__main__":
    input_dim = 2
    hidden_layers = [32, 32]
    N = 1024                 # multiple of 128 (lane-dense tiles)

    key = jax.random.PRNGKey(0)
    key, kx = jax.random.split(key)
    lb = jnp.array([[-1.0, 0.0]], dtype=jnp.float32)   # (1, input_dim)
    ub = jnp.array([[1.0, 2.0]], dtype=jnp.float32)
    # Feature-major inputs (in_dim, N): batch on the lane axis, no transpose needed.
    u = jax.random.uniform(kx, (input_dim, N), jnp.float32)
    x_fm = u * jnp.transpose(ub - lb) + jnp.transpose(lb)

    params = build_params(key, input_dim, hidden_layers)

    fwd = jax.jit(ann_forward_pallas_fm)
    y_fm = jax.block_until_ready(fwd(x_fm, lb, ub, params))
    assert y_fm.shape == (1, N)

    # References: fused/bf16 mirror (tight) and the original f32 module math
    # (looser bound — the kernel feeds true-bf16 operands to the MXU).
    meta, w0T, bias_all, wpack = prepare_kernel_params(lb, ub, params)
    with jax.default_matmul_precision("highest"):
        y_fused = ann_forward_fused_ref_fm(x_fm, meta, w0T, bias_all, wpack)
        y_ref = ann_forward_ref(jnp.transpose(x_fm), lb, ub, params)
    err_fused = float(jnp.max(jnp.abs(y_fm - y_fused)))
    err_ref = float(jnp.max(jnp.abs(y_fm[0, :] - y_ref[:, 0])))
    assert err_fused < 1e-3, f"kernel != fused bf16 reference (max err {err_fused})"
    assert err_ref < 2e-2, f"kernel != original ANN reference (max err {err_ref})"

    # Drop-in (N, in_dim) -> (N, 1) wrapper gives identical numbers.
    y_nc = jax.block_until_ready(
        ann_forward_pallas(jnp.transpose(x_fm), lb, ub, params))
    assert y_nc.shape == (N, 1)
    assert float(jnp.max(jnp.abs(y_nc[:, 0] - y_fm[0, :]))) < 1e-6

    print("KERNEL_OK")
</pallas_src>

<mosaic_0001>
module attributes {stable_mosaic.version = 11 : i64} {
  func.func @_ann_kernel(%arg0: i32, %arg1: memref<2x1024xf32, #tpu.memory_space<vmem>>, %arg2: memref<64x2xf32, #tpu.memory_space<vmem>>, %arg3: memref<200x1xf32, #tpu.memory_space<vmem>>, %arg4: memref<144x32xbf16, #tpu.memory_space<vmem>>, %arg5: memref<1x1024xf32, #tpu.memory_space<vmem>>) attributes {dimension_semantics = [#tpu.dimension_semantics<parallel>], iteration_bounds = array<i64: 1>, scalar_prefetch = 0 : i64, scratch_operands = 0 : i64, tpu.core_type = #tpu.core_type<tc>, window_params = [{transform_indices = @transform_0, window_bounds = array<i64: 2, 1024>}, {pipeline_mode = #tpu.pipeline_mode<synchronous>, transform_indices = @transform_1, window_bounds = array<i64: 64, 2>}, {pipeline_mode = #tpu.pipeline_mode<synchronous>, transform_indices = @transform_2, window_bounds = array<i64: 200, 1>}, {pipeline_mode = #tpu.pipeline_mode<synchronous>, transform_indices = @transform_3, window_bounds = array<i64: 144, 32>}, {transform_indices = @transform_4, window_bounds = array<i64: 1, 1024>}]} {
    %c0 = arith.constant 0 : index
    %c0_0 = arith.constant 0 : index
    %0 = vector.load %arg1[%c0, %c0_0] : memref<2x1024xf32, #tpu.memory_space<vmem>>, vector<2x1024xf32>
    %c0_1 = arith.constant 0 : index
    %c0_2 = arith.constant 0 : index
    %1 = vector.load %arg3[%c0_1, %c0_2] : memref<200x1xf32, #tpu.memory_space<vmem>>, vector<64x1xf32>
    %c0_3 = arith.constant 0 : index
    %c0_4 = arith.constant 0 : index
    %2 = vector.load %arg2[%c0_3, %c0_4] : memref<64x2xf32, #tpu.memory_space<vmem>>, vector<64x2xf32>
    %3 = vector.extract_strided_slice %2 {offsets = [0, 0], sizes = [64, 1], strides = [1, 1]} : vector<64x2xf32> to vector<64x1xf32>
    %4 = vector.extract_strided_slice %0 {offsets = [0, 0], sizes = [1, 1024], strides = [1, 1]} : vector<2x1024xf32> to vector<1x1024xf32>
    %5 = vector.broadcast %3 : vector<64x1xf32> to vector<64x1024xf32>
    %6 = vector.broadcast %4 : vector<1x1024xf32> to vector<64x1024xf32>
    %7 = arith.mulf %5, %6 : vector<64x1024xf32>
    %8 = vector.extract_strided_slice %2 {offsets = [0, 1], sizes = [64, 1], strides = [1, 1]} : vector<64x2xf32> to vector<64x1xf32>
    %9 = vector.extract_strided_slice %0 {offsets = [1, 0], sizes = [1, 1024], strides = [1, 1]} : vector<2x1024xf32> to vector<1x1024xf32>
    %10 = vector.broadcast %8 : vector<64x1xf32> to vector<64x1024xf32>
    %11 = vector.broadcast %9 : vector<1x1024xf32> to vector<64x1024xf32>
    %12 = arith.mulf %10, %11 : vector<64x1024xf32>
    %13 = arith.addf %7, %12 : vector<64x1024xf32>
    %14 = vector.broadcast %1 : vector<64x1xf32> to vector<64x1024xf32>
    %15 = arith.addf %13, %14 : vector<64x1024xf32>
    %16 = vector.extract_strided_slice %15 {offsets = [0, 0], sizes = [32, 1024], strides = [1, 1]} : vector<64x1024xf32> to vector<32x1024xf32>
    %17 = vector.extract_strided_slice %15 {offsets = [32, 0], sizes = [32, 1024], strides = [1, 1]} : vector<64x1024xf32> to vector<32x1024xf32>
    %c0_5 = arith.constant 0 : index
    %c0_6 = arith.constant 0 : index
    %18 = vector.load %arg4[%c0_5, %c0_6] : memref<144x32xbf16, #tpu.memory_space<vmem>>, vector<32x32xbf16>
    %cst = arith.constant 0.000000e+00 : f32
    %19 = vector.broadcast %cst : f32 to vector<32x1024xf32>
    %20 = arith.maximumf %17, %19 : vector<32x1024xf32>
    %21 = arith.truncf %20 : vector<32x1024xf32> to vector<32x1024xbf16>
    %cst_7 = arith.constant dense<0.000000e+00> : vector<32x1024xf32>
    %22 = tpu.matmul %18, %21, %cst_7 {dimension_numbers = #tpu.dot_dimension_numbers<[1], [0], [0], [1], [0, 0, 1, 1], [], []>} : vector<32x32xbf16>, vector<32x1024xbf16>, vector<32x1024xf32> -> vector<32x1024xf32>
    %c64 = arith.constant 64 : index
    %c0_8 = arith.constant 0 : index
    %23 = vector.load %arg3[%c64, %c0_8] : memref<200x1xf32, #tpu.memory_space<vmem>>, vector<32x1xf32>
    %24 = vector.broadcast %23 : vector<32x1xf32> to vector<32x1024xf32>
    %25 = arith.addf %22, %24 : vector<32x1024xf32>
    %26 = arith.addf %16, %25 : vector<32x1024xf32>
    %27 = math.tanh %26 : vector<32x1024xf32>
    %c96 = arith.constant 96 : index
    %c0_9 = arith.constant 0 : index
    %28 = vector.load %arg3[%c96, %c0_9] : memref<200x1xf32, #tpu.memory_space<vmem>>, vector<64x1xf32>
    %c64_10 = arith.constant 64 : index
    %c0_11 = arith.constant 0 : index
    %29 = vector.load %arg4[%c64_10, %c0_11] : memref<144x32xbf16, #tpu.memory_space<vmem>>, vector<64x32xbf16>
    %30 = arith.truncf %27 : vector<32x1024xf32> to vector<32x1024xbf16>
    %cst_12 = arith.constant dense<0.000000e+00> : vector<64x1024xf32>
    %31 = tpu.matmul %29, %30, %cst_12 {dimension_numbers = #tpu.dot_dimension_numbers<[1], [0], [0], [1], [0, 0, 1, 1], [], []>} : vector<64x32xbf16>, vector<32x1024xbf16>, vector<64x1024xf32> -> vector<64x1024xf32>
    %32 = vector.broadcast %28 : vector<64x1xf32> to vector<64x1024xf32>
    %33 = arith.addf %31, %32 : vector<64x1024xf32>
    %34 = vector.extract_strided_slice %33 {offsets = [0, 0], sizes = [32, 1024], strides = [1, 1]} : vector<64x1024xf32> to vector<32x1024xf32>
    %35 = vector.extract_strided_slice %33 {offsets = [32, 0], sizes = [32, 1024], strides = [1, 1]} : vector<64x1024xf32> to vector<32x1024xf32>
    %c32 = arith.constant 32 : index
    %c0_13 = arith.constant 0 : index
    %36 = vector.load %arg4[%c32, %c0_13] : memref<144x32xbf16, #tpu.memory_space<vmem>>, vector<32x32xbf16>
    %cst_14 = arith.constant 0.000000e+00 : f32
    %37 = vector.broadcast %cst_14 : f32 to vector<32x1024xf32>
    %38 = arith.maximumf %35, %37 : vector<32x1024xf32>
    %39 = arith.truncf %38 : vector<32x1024xf32> to vector<32x1024xbf16>
    %cst_15 = arith.constant dense<0.000000e+00> : vector<32x1024xf32>
    %40 = tpu.matmul %36, %39, %cst_15 {dimension_numbers = #tpu.dot_dimension_numbers<[1], [0], [0], [1], [0, 0, 1, 1], [], []>} : vector<32x32xbf16>, vector<32x1024xbf16>, vector<32x1024xf32> -> vector<32x1024xf32>
    %c160 = arith.constant 160 : index
    %c0_16 = arith.constant 0 : index
    %41 = vector.load %arg3[%c160, %c0_16] : memref<200x1xf32, #tpu.memory_space<vmem>>, vector<32x1xf32>
    %42 = vector.broadcast %41 : vector<32x1xf32> to vector<32x1024xf32>
    %43 = arith.addf %40, %42 : vector<32x1024xf32>
    %44 = arith.addf %34, %43 : vector<32x1024xf32>
    %45 = math.tanh %44 : vector<32x1024xf32>
    %c128 = arith.constant 128 : index
    %c0_17 = arith.constant 0 : index
    %46 = vector.load %arg4[%c128, %c0_17] : memref<144x32xbf16, #tpu.memory_space<vmem>>, vector<8x32xbf16>
    %47 = arith.truncf %45 : vector<32x1024xf32> to vector<32x1024xbf16>
    %cst_18 = arith.constant dense<0.000000e+00> : vector<8x1024xf32>
    %48 = tpu.matmul %46, %47, %cst_18 {dimension_numbers = #tpu.dot_dimension_numbers<[1], [0], [0], [1], [0, 0, 1, 1], [], []>} : vector<8x32xbf16>, vector<32x1024xbf16>, vector<8x1024xf32> -> vector<8x1024xf32>
    %49 = vector.extract_strided_slice %48 {offsets = [0, 0], sizes = [1, 1024], strides = [1, 1]} : vector<8x1024xf32> to vector<1x1024xf32>
    %c192 = arith.constant 192 : index
    %c0_19 = arith.constant 0 : index
    %50 = vector.load %arg3[%c192, %c0_19] : memref<200x1xf32, #tpu.memory_space<vmem>>, vector<1x1xf32>
    %51 = vector.broadcast %50 : vector<1x1xf32> to vector<1x1024xf32>
    %52 = arith.addf %49, %51 : vector<1x1024xf32>
    %53 = math.tanh %52 : vector<1x1024xf32>
    %cst_20 = arith.constant 1.000000e+00 : f32
    %54 = vector.broadcast %cst_20 : f32 to vector<1x1024xf32>
    %55 = arith.addf %53, %54 : vector<1x1024xf32>
    %cst_21 = arith.constant 5.000000e-01 : f32
    %56 = vector.broadcast %cst_21 : f32 to vector<1x1024xf32>
    %57 = arith.mulf %56, %55 : vector<1x1024xf32>
    %c0_22 = arith.constant 0 : index
    %c0_23 = arith.constant 0 : index
    %58 = vector.load %arg5[%c0_22, %c0_23] : memref<1x1024xf32, #tpu.memory_space<vmem>>, vector<1x1024xf32>
    tpu.vector_store %arg5[%c0_22, %c0_23], %57 {strides = array<i32>} : memref<1x1024xf32, #tpu.memory_space<vmem>>, vector<1x1024xf32>,
    return
  }
  func.func @transform_0(%arg0: i32) -> (i32, i32) {
    %c0_i32 = arith.constant 0 : i32
    %c0_i32_0 = arith.constant 0 : i32
    return %c0_i32, %arg0 : i32, i32
  }
  func.func @transform_1(%arg0: i32) -> (i32, i32) {
    %c0_i32 = arith.constant 0 : i32
    %c0_i32_0 = arith.constant 0 : i32
    %c0_i32_1 = arith.constant 0 : i32
    return %c0_i32, %c0_i32_0 : i32, i32
  }
  func.func @transform_2(%arg0: i32) -> (i32, i32) {
    %c0_i32 = arith.constant 0 : i32
    %c0_i32_0 = arith.constant 0 : i32
    %c0_i32_1 = arith.constant 0 : i32
    return %c0_i32, %c0_i32_0 : i32, i32
  }
  func.func @transform_3(%arg0: i32) -> (i32, i32) {
    %c0_i32 = arith.constant 0 : i32
    %c0_i32_0 = arith.constant 0 : i32
    %c0_i32_1 = arith.constant 0 : i32
    return %c0_i32, %c0_i32_0 : i32, i32
  }
  func.func @transform_4(%arg0: i32) -> (i32, i32) {
    %c0_i32 = arith.constant 0 : i32
    %c0_i32_0 = arith.constant 0 : i32
    return %c0_i32, %arg0 : i32, i32
  }
}

</mosaic_0001>

<llo_original>
// kernel: ann_forward_pallas_fm.1
$region0: #{ann_forward_pallas_fm.1}
  #allocation0 [shape = 'u32[]', space=smem, size = 0x4, offset = 0x4, fixed_abs, tag = 'smem constant byte address 0x4 - core index']
  #allocation1 [shape = 'u32[144,128]{1,0:T(1,128)}', space=vmem, size = 0x12000, scoped, tag = 'internal scratch']
  %s0 = inlined_call_operand.vmem [shape: f32[2,1024], index: 0, kind: input, shape index: {}]
  %s1 = inlined_call_operand.vmem [shape: f32[64,2], index: 1, kind: input, shape index: {}]
  %s2 = inlined_call_operand.vmem [shape: f32[200,1], index: 2, kind: input, shape index: {}]
  %s3 = inlined_call_operand.vmem [shape: bf16[144,32], index: 3, kind: input, shape index: {}]
  %s4 = inlined_call_operand.hbm [shape: f32[1,1024], index: 4, kind: output, shape index: {}]
  %s5 = sld [smem:[#allocation0]]
  $region26: #{ann_forward_pallas_fm.1} parent=0
    _
  %s7 = ssub.s32 1, %s5
  %s8 = scalar_select 0, %s7, %s5
  $region1: #{ann_forward_pallas_fm.1} parent=0
    #allocation2 [shape = 'u8[4096]{0}', space=vmem, size = 0x1000, scoped, tag = 'output window, operand 0, single buffered']
    #allocation3 [shape = 's32[1]{0}', space=sflag, size = 0x4, scoped, tag = 'scoped memory for ann_forward_pallas_fm.1']
    %9 = vsyncpa [#allocation3], 0
    // Predicated region
    $region2: #{ann_forward_pallas_fm.1} parent=1 // pred_check
      _
    $region3: #{ann_forward_pallas_fm.1} parent=1 // pred_check_branch
      %11 = sbr.rel (0) target = $region5
    $region4: #{ann_forward_pallas_fm.1} parent=1 // pred_region
      _
    $region5: #{ann_forward_pallas_fm.1} parent=1 // pred_fallthru
      _
    // Predicated region
    $region6: #{ann_forward_pallas_fm.1} parent=1 // pred_check
      _
    $region7: #{ann_forward_pallas_fm.1} parent=1 // pred_check_branch
      %13 = sbr.rel (0) target = $region9
    $region8: #{ann_forward_pallas_fm.1} parent=1 // pred_region
      _
    $region9: #{ann_forward_pallas_fm.1} parent=1 // pred_fallthru
      _
    // Predicated region
    $region10: #{ann_forward_pallas_fm.1} parent=1 // pred_check
      _
    $region11: #{ann_forward_pallas_fm.1} parent=1 // pred_check_branch
      %15 = sbr.rel (0) target = $region13
    $region12: #{ann_forward_pallas_fm.1} parent=1 // pred_region
      _
    $region13: #{ann_forward_pallas_fm.1} parent=1 // pred_fallthru
      _
    // Predicated region
    $region14: #{ann_forward_pallas_fm.1} parent=1 // pred_check
      _
    $region15: #{ann_forward_pallas_fm.1} parent=1 // pred_check_branch
      %17 = sbr.rel (0) target = $region17
    $region16: #{ann_forward_pallas_fm.1} parent=1 // pred_region
      _
    $region17: #{ann_forward_pallas_fm.1} parent=1 // pred_fallthru
      _
    %v19 = vld [vmem:[%s0] sm:$0xff]
    %v20 = vld [vmem:[%s0 + $0x8] sm:$0xff]
    %v21 = vld [vmem:[%s2] sm:$0xff]
    %v22 = vld [vmem:[%s2 + $0x8] sm:$0xff]
    %v23 = vld [vmem:[%s2 + $0x10] sm:$0xff]
    %v24 = vld [vmem:[%s2 + $0x18] sm:$0xff]
    %v25 = vld [vmem:[%s2 + $0x20] sm:$0xff]
    %v26 = vld [vmem:[%s2 + $0x28] sm:$0xff]
    %v27 = vld [vmem:[%s2 + $0x30] sm:$0xff]
    %v28 = vld [vmem:[%s2 + $0x38] sm:$0xff]
    %v29 = vld [vmem:[%s1] sm:$0xff]
    %v30 = vld [vmem:[%s1 + $0x8] sm:$0xff]
    %v31 = vld [vmem:[%s1 + $0x10] sm:$0xff]
    %v32 = vld [vmem:[%s1 + $0x18] sm:$0xff]
    %v33 = vld [vmem:[%s1 + $0x20] sm:$0xff]
    %v34 = vld [vmem:[%s1 + $0x28] sm:$0xff]
    %v35 = vld [vmem:[%s1 + $0x30] sm:$0xff]
    %v36 = vld [vmem:[%s1 + $0x38] sm:$0xff]
    %38 = vset.pattern.permute.xlu0 0
    %39 = vperm.xlu0 %38, %v29
    %v40 = vpop.permute.xlu0 %39
    %43 = vset.pattern.permute.xlu0 0
    %44 = vperm.xlu0 %43, %v30
    %v45 = vpop.permute.xlu0 %44
    %48 = vset.pattern.permute.xlu0 0
    %49 = vperm.xlu0 %48, %v31
    %v50 = vpop.permute.xlu0 %49
    %53 = vset.pattern.permute.xlu0 0
    %54 = vperm.xlu0 %53, %v32
    %v55 = vpop.permute.xlu0 %54
    %58 = vset.pattern.permute.xlu0 0
    %59 = vperm.xlu0 %58, %v33
    %v60 = vpop.permute.xlu0 %59
    %63 = vset.pattern.permute.xlu0 0
    %64 = vperm.xlu0 %63, %v34
    %v65 = vpop.permute.xlu0 %64
    %68 = vset.pattern.permute.xlu0 0
    %69 = vperm.xlu0 %68, %v35
    %v70 = vpop.permute.xlu0 %69
    %73 = vset.pattern.permute.xlu0 0
    %74 = vperm.xlu0 %73, %v36
    %v75 = vpop.permute.xlu0 %74
    %v79 = vlaneseq
    %v80 = vshrl.u32 %v79, 7
    %v81 = vsub.s32 0, %v80
    %v82 = vrot.slane %v19, %v81
    %v83 = vlaneseq
    %v84 = vshrl.u32 %v83, 7
    %v85 = vsub.s32 2, %v84
    %v86 = vrot.slane %v19, %v85
    %v87 = vlaneseq
    %v88 = vshrl.u32 %v87, 7
    %v89 = vsub.s32 4, %v88
    %v90 = vrot.slane %v19, %v89
    %v91 = vlaneseq
    %v92 = vshrl.u32 %v91, 7
    %v93 = vsub.s32 6, %v92
    %v94 = vrot.slane %v19, %v93
    %v95 = vlaneseq
    %v96 = vshrl.u32 %v95, 7
    %v97 = vsub.s32 0, %v96
    %v98 = vrot.slane %v20, %v97
    %v99 = vlaneseq
    %v100 = vshrl.u32 %v99, 7
    %v101 = vsub.s32 2, %v100
    %v102 = vrot.slane %v20, %v101
    %v103 = vlaneseq
    %v104 = vshrl.u32 %v103, 7
    %v105 = vsub.s32 4, %v104
    %v106 = vrot.slane %v20, %v105
    %v107 = vlaneseq
    %v108 = vshrl.u32 %v107, 7
    %v109 = vsub.s32 6, %v108
    %v110 = vrot.slane %v20, %v109
    %v119 = vlaneseq
    %v120 = vshrl.u32 %v119, 7
    %v121 = vsub.s32 0, %v120
    %v122 = vrot.slane %v82, %v121
    %v123 = vlaneseq
    %v124 = vshrl.u32 %v123, 7
    %v125 = vsub.s32 0, %v124
    %v126 = vrot.slane %v86, %v125
    %v127 = vlaneseq
    %v128 = vshrl.u32 %v127, 7
    %v129 = vsub.s32 0, %v128
    %v130 = vrot.slane %v90, %v129
    %v131 = vlaneseq
    %v132 = vshrl.u32 %v131, 7
    %v133 = vsub.s32 0, %v132
    %v134 = vrot.slane %v94, %v133
    %v135 = vlaneseq
    %v136 = vshrl.u32 %v135, 7
    %v137 = vsub.s32 0, %v136
    %v138 = vrot.slane %v98, %v137
    %v139 = vlaneseq
    %v140 = vshrl.u32 %v139, 7
    %v141 = vsub.s32 0, %v140
    %v142 = vrot.slane %v102, %v141
    %v143 = vlaneseq
    %v144 = vshrl.u32 %v143, 7
    %v145 = vsub.s32 0, %v144
    %v146 = vrot.slane %v106, %v145
    %v147 = vlaneseq
    %v148 = vshrl.u32 %v147, 7
    %v149 = vsub.s32 0, %v148
    %v150 = vrot.slane %v110, %v149
    %v151 = vmul.f32 %v40, %v122
    %v152 = vmul.f32 %v40, %v126
    %v153 = vmul.f32 %v40, %v130
    %v154 = vmul.f32 %v40, %v134
    %v155 = vmul.f32 %v40, %v138
    %v156 = vmul.f32 %v40, %v142
    %v157 = vmul.f32 %v40, %v146
    %v158 = vmul.f32 %v40, %v150
    %v159 = vmul.f32 %v45, %v122
    %v160 = vmul.f32 %v45, %v126
    %v161 = vmul.f32 %v45, %v130
    %v162 = vmul.f32 %v45, %v134
    %v163 = vmul.f32 %v45, %v138
    %v164 = vmul.f32 %v45, %v142
    %v165 = vmul.f32 %v45, %v146
    %v166 = vmul.f32 %v45, %v150
    %v167 = vmul.f32 %v50, %v122
    %v168 = vmul.f32 %v50, %v126
    %v169 = vmul.f32 %v50, %v130
    %v170 = vmul.f32 %v50, %v134
    %v171 = vmul.f32 %v50, %v138
    %v172 = vmul.f32 %v50, %v142
    %v173 = vmul.f32 %v50, %v146
    %v174 = vmul.f32 %v50, %v150
    %v175 = vmul.f32 %v55, %v122
    %v176 = vmul.f32 %v55, %v126
    %v177 = vmul.f32 %v55, %v130
    %v178 = vmul.f32 %v55, %v134
    %v179 = vmul.f32 %v55, %v138
    %v180 = vmul.f32 %v55, %v142
    %v181 = vmul.f32 %v55, %v146
    %v182 = vmul.f32 %v55, %v150
    %v183 = vmul.f32 %v60, %v122
    %v184 = vmul.f32 %v60, %v126
    %v185 = vmul.f32 %v60, %v130
    %v186 = vmul.f32 %v60, %v134
    %v187 = vmul.f32 %v60, %v138
    %v188 = vmul.f32 %v60, %v142
    %v189 = vmul.f32 %v60, %v146
    %v190 = vmul.f32 %v60, %v150
    %v191 = vmul.f32 %v65, %v122
    %v192 = vmul.f32 %v65, %v126
    %v193 = vmul.f32 %v65, %v130
    %v194 = vmul.f32 %v65, %v134
    %v195 = vmul.f32 %v65, %v138
    %v196 = vmul.f32 %v65, %v142
    %v197 = vmul.f32 %v65, %v146
    %v198 = vmul.f32 %v65, %v150
    %v199 = vmul.f32 %v70, %v122
    %v200 = vmul.f32 %v70, %v126
    %v201 = vmul.f32 %v70, %v130
    %v202 = vmul.f32 %v70, %v134
    %v203 = vmul.f32 %v70, %v138
    %v204 = vmul.f32 %v70, %v142
    %v205 = vmul.f32 %v70, %v146
    %v206 = vmul.f32 %v70, %v150
    %v207 = vmul.f32 %v75, %v122
    %v208 = vmul.f32 %v75, %v126
    %v209 = vmul.f32 %v75, %v130
    %v210 = vmul.f32 %v75, %v134
    %v211 = vmul.f32 %v75, %v138
    %v212 = vmul.f32 %v75, %v142
    %v213 = vmul.f32 %v75, %v146
    %v214 = vmul.f32 %v75, %v150
    %215 = vset.pattern.permute.xlu0 1
    %216 = vperm.xlu0 %215, %v29
    %v217 = vpop.permute.xlu0 %216
    %219 = vset.pattern.permute.xlu0 1
    %220 = vperm.xlu0 %219, %v30
    %v221 = vpop.permute.xlu0 %220
    %223 = vset.pattern.permute.xlu0 1
    %224 = vperm.xlu0 %223, %v31
    %v225 = vpop.permute.xlu0 %224
    %227 = vset.pattern.permute.xlu0 1
    %228 = vperm.xlu0 %227, %v32
    %v229 = vpop.permute.xlu0 %228
    %231 = vset.pattern.permute.xlu0 1
    %232 = vperm.xlu0 %231, %v33
    %v233 = vpop.permute.xlu0 %232
    %235 = vset.pattern.permute.xlu0 1
    %236 = vperm.xlu0 %235, %v34
    %v237 = vpop.permute.xlu0 %236
    %239 = vset.pattern.permute.xlu0 1
    %240 = vperm.xlu0 %239, %v35
    %v241 = vpop.permute.xlu0 %240
    %243 = vset.pattern.permute.xlu0 1
    %244 = vperm.xlu0 %243, %v36
    %v245 = vpop.permute.xlu0 %244
    %v247 = vlaneseq
    %v248 = vshrl.u32 %v247, 7
    %v249 = vsub.s32 1, %v248
    %v250 = vrot.slane %v19, %v249
    %v251 = vlaneseq
    %v252 = vshrl.u32 %v251, 7
    %v253 = vsub.s32 3, %v252
    %v254 = vrot.slane %v19, %v253
    %v255 = vlaneseq
    %v256 = vshrl.u32 %v255, 7
    %v257 = vsub.s32 5, %v256
    %v258 = vrot.slane %v19, %v257
    %v259 = vlaneseq
    %v260 = vshrl.u32 %v259, 7
    %v261 = vsub.s32 7, %v260
    %v262 = vrot.slane %v19, %v261
    %v263 = vlaneseq
    %v264 = vshrl.u32 %v263, 7
    %v265 = vsub.s32 1, %v264
    %v266 = vrot.slane %v20, %v265
    %v267 = vlaneseq
    %v268 = vshrl.u32 %v267, 7
    %v269 = vsub.s32 3, %v268
    %v270 = vrot.slane %v20, %v269
    %v271 = vlaneseq
    %v272 = vshrl.u32 %v271, 7
    %v273 = vsub.s32 5, %v272
    %v274 = vrot.slane %v20, %v273
    %v275 = vlaneseq
    %v276 = vshrl.u32 %v275, 7
    %v277 = vsub.s32 7, %v276
    %v278 = vrot.slane %v20, %v277
    %v287 = vlaneseq
    %v288 = vshrl.u32 %v287, 7
    %v289 = vsub.s32 1, %v288
    %v290 = vrot.slane %v250, %v289
    %v291 = vlaneseq
    %v292 = vshrl.u32 %v291, 7
    %v293 = vsub.s32 1, %v292
    %v294 = vrot.slane %v254, %v293
    %v295 = vlaneseq
    %v296 = vshrl.u32 %v295, 7
    %v297 = vsub.s32 1, %v296
    %v298 = vrot.slane %v258, %v297
    %v299 = vlaneseq
    %v300 = vshrl.u32 %v299, 7
    %v301 = vsub.s32 1, %v300
    %v302 = vrot.slane %v262, %v301
    %v303 = vlaneseq
    %v304 = vshrl.u32 %v303, 7
    %v305 = vsub.s32 1, %v304
    %v306 = vrot.slane %v266, %v305
    %v307 = vlaneseq
    %v308 = vshrl.u32 %v307, 7
    %v309 = vsub.s32 1, %v308
    %v310 = vrot.slane %v270, %v309
    %v311 = vlaneseq
    %v312 = vshrl.u32 %v311, 7
    %v313 = vsub.s32 1, %v312
    %v314 = vrot.slane %v274, %v313
    %v315 = vlaneseq
    %v316 = vshrl.u32 %v315, 7
    %v317 = vsub.s32 1, %v316
    %v318 = vrot.slane %v278, %v317
    %v319 = vmul.f32 %v217, %v290
    %v320 = vmul.f32 %v217, %v294
    %v321 = vmul.f32 %v217, %v298
    %v322 = vmul.f32 %v217, %v302
    %v323 = vmul.f32 %v217, %v306
    %v324 = vmul.f32 %v217, %v310
    %v325 = vmul.f32 %v217, %v314
    %v326 = vmul.f32 %v217, %v318
    %v327 = vmul.f32 %v221, %v290
    %v328 = vmul.f32 %v221, %v294
    %v329 = vmul.f32 %v221, %v298
    %v330 = vmul.f32 %v221, %v302
    %v331 = vmul.f32 %v221, %v306
    %v332 = vmul.f32 %v221, %v310
    %v333 = vmul.f32 %v221, %v314
    %v334 = vmul.f32 %v221, %v318
    %v335 = vmul.f32 %v225, %v290
    %v336 = vmul.f32 %v225, %v294
    %v337 = vmul.f32 %v225, %v298
    %v338 = vmul.f32 %v225, %v302
    %v339 = vmul.f32 %v225, %v306
    %v340 = vmul.f32 %v225, %v310
    %v341 = vmul.f32 %v225, %v314
    %v342 = vmul.f32 %v225, %v318
    %v343 = vmul.f32 %v229, %v290
    %v344 = vmul.f32 %v229, %v294
    %v345 = vmul.f32 %v229, %v298
    %v346 = vmul.f32 %v229, %v302
    %v347 = vmul.f32 %v229, %v306
    %v348 = vmul.f32 %v229, %v310
    %v349 = vmul.f32 %v229, %v314
    %v350 = vmul.f32 %v229, %v318
    %v351 = vmul.f32 %v233, %v290
    %v352 = vmul.f32 %v233, %v294
    %v353 = vmul.f32 %v233, %v298
    %v354 = vmul.f32 %v233, %v302
    %v355 = vmul.f32 %v233, %v306
    %v356 = vmul.f32 %v233, %v310
    %v357 = vmul.f32 %v233, %v314
    %v358 = vmul.f32 %v233, %v318
    %v359 = vmul.f32 %v237, %v290
    %v360 = vmul.f32 %v237, %v294
    %v361 = vmul.f32 %v237, %v298
    %v362 = vmul.f32 %v237, %v302
    %v363 = vmul.f32 %v237, %v306
    %v364 = vmul.f32 %v237, %v310
    %v365 = vmul.f32 %v237, %v314
    %v366 = vmul.f32 %v237, %v318
    %v367 = vmul.f32 %v241, %v290
    %v368 = vmul.f32 %v241, %v294
    %v369 = vmul.f32 %v241, %v298
    %v370 = vmul.f32 %v241, %v302
    %v371 = vmul.f32 %v241, %v306
    %v372 = vmul.f32 %v241, %v310
    %v373 = vmul.f32 %v241, %v314
    %v374 = vmul.f32 %v241, %v318
    %v375 = vmul.f32 %v245, %v290
    %v376 = vmul.f32 %v245, %v294
    %v377 = vmul.f32 %v245, %v298
    %v378 = vmul.f32 %v245, %v302
    %v379 = vmul.f32 %v245, %v306
    %v380 = vmul.f32 %v245, %v310
    %v381 = vmul.f32 %v245, %v314
    %v382 = vmul.f32 %v245, %v318
    %v383 = vadd.f32 %v151, %v319
    %v384 = vadd.f32 %v152, %v320
    %v385 = vadd.f32 %v153, %v321
    %v386 = vadd.f32 %v154, %v322
    %v387 = vadd.f32 %v155, %v323
    %v388 = vadd.f32 %v156, %v324
    %v389 = vadd.f32 %v157, %v325
    %v390 = vadd.f32 %v158, %v326
    %v391 = vadd.f32 %v159, %v327
    %v392 = vadd.f32 %v160, %v328
    %v393 = vadd.f32 %v161, %v329
    %v394 = vadd.f32 %v162, %v330
    %v395 = vadd.f32 %v163, %v331
    %v396 = vadd.f32 %v164, %v332
    %v397 = vadd.f32 %v165, %v333
    %v398 = vadd.f32 %v166, %v334
    %v399 = vadd.f32 %v167, %v335
    %v400 = vadd.f32 %v168, %v336
    %v401 = vadd.f32 %v169, %v337
    %v402 = vadd.f32 %v170, %v338
    %v403 = vadd.f32 %v171, %v339
    %v404 = vadd.f32 %v172, %v340
    %v405 = vadd.f32 %v173, %v341
    %v406 = vadd.f32 %v174, %v342
    %v407 = vadd.f32 %v175, %v343
    %v408 = vadd.f32 %v176, %v344
    %v409 = vadd.f32 %v177, %v345
    %v410 = vadd.f32 %v178, %v346
    %v411 = vadd.f32 %v179, %v347
    %v412 = vadd.f32 %v180, %v348
    %v413 = vadd.f32 %v181, %v349
    %v414 = vadd.f32 %v182, %v350
    %v415 = vadd.f32 %v183, %v351
    %v416 = vadd.f32 %v184, %v352
    %v417 = vadd.f32 %v185, %v353
    %v418 = vadd.f32 %v186, %v354
    %v419 = vadd.f32 %v187, %v355
    %v420 = vadd.f32 %v188, %v356
    %v421 = vadd.f32 %v189, %v357
    %v422 = vadd.f32 %v190, %v358
    %v423 = vadd.f32 %v191, %v359
    %v424 = vadd.f32 %v192, %v360
    %v425 = vadd.f32 %v193, %v361
    %v426 = vadd.f32 %v194, %v362
    %v427 = vadd.f32 %v195, %v363
    %v428 = vadd.f32 %v196, %v364
    %v429 = vadd.f32 %v197, %v365
    %v430 = vadd.f32 %v198, %v366
    %v431 = vadd.f32 %v199, %v367
    %v432 = vadd.f32 %v200, %v368
    %v433 = vadd.f32 %v201, %v369
    %v434 = vadd.f32 %v202, %v370
    %v435 = vadd.f32 %v203, %v371
    %v436 = vadd.f32 %v204, %v372
    %v437 = vadd.f32 %v205, %v373
    %v438 = vadd.f32 %v206, %v374
    %v439 = vadd.f32 %v207, %v375
    %v440 = vadd.f32 %v208, %v376
    %v441 = vadd.f32 %v209, %v377
    %v442 = vadd.f32 %v210, %v378
    %v443 = vadd.f32 %v211, %v379
    %v444 = vadd.f32 %v212, %v380
    %v445 = vadd.f32 %v213, %v381
    %v446 = vadd.f32 %v214, %v382
    %448 = vset.pattern.permute.xlu0 0
    %449 = vperm.xlu0 %448, %v21
    %v450 = vpop.permute.xlu0 %449
    %453 = vset.pattern.permute.xlu0 0
    %454 = vperm.xlu0 %453, %v22
    %v455 = vpop.permute.xlu0 %454
    %458 = vset.pattern.permute.xlu0 0
    %459 = vperm.xlu0 %458, %v23
    %v460 = vpop.permute.xlu0 %459
    %463 = vset.pattern.permute.xlu0 0
    %464 = vperm.xlu0 %463, %v24
    %v465 = vpop.permute.xlu0 %464
    %468 = vset.pattern.permute.xlu0 0
    %469 = vperm.xlu0 %468, %v25
    %v470 = vpop.permute.xlu0 %469
    %473 = vset.pattern.permute.xlu0 0
    %474 = vperm.xlu0 %473, %v26
    %v475 = vpop.permute.xlu0 %474
    %478 = vset.pattern.permute.xlu0 0
    %479 = vperm.xlu0 %478, %v27
    %v480 = vpop.permute.xlu0 %479
    %483 = vset.pattern.permute.xlu0 0
    %484 = vperm.xlu0 %483, %v28
    %v485 = vpop.permute.xlu0 %484
    %v487 = vadd.f32 %v383, %v450
    %v488 = vadd.f32 %v384, %v450
    %v489 = vadd.f32 %v385, %v450
    %v490 = vadd.f32 %v386, %v450
    %v491 = vadd.f32 %v387, %v450
    %v492 = vadd.f32 %v388, %v450
    %v493 = vadd.f32 %v389, %v450
    %v494 = vadd.f32 %v390, %v450
    %v495 = vadd.f32 %v391, %v455
    %v496 = vadd.f32 %v392, %v455
    %v497 = vadd.f32 %v393, %v455
    %v498 = vadd.f32 %v394, %v455
    %v499 = vadd.f32 %v395, %v455
    %v500 = vadd.f32 %v396, %v455
    %v501 = vadd.f32 %v397, %v455
    %v502 = vadd.f32 %v398, %v455
    %v503 = vadd.f32 %v399, %v460
    %v504 = vadd.f32 %v400, %v460
    %v505 = vadd.f32 %v401, %v460
    %v506 = vadd.f32 %v402, %v460
    %v507 = vadd.f32 %v403, %v460
    %v508 = vadd.f32 %v404, %v460
    %v509 = vadd.f32 %v405, %v460
    %v510 = vadd.f32 %v406, %v460
    %v511 = vadd.f32 %v407, %v465
    %v512 = vadd.f32 %v408, %v465
    %v513 = vadd.f32 %v409, %v465
    %v514 = vadd.f32 %v410, %v465
    %v515 = vadd.f32 %v411, %v465
    %v516 = vadd.f32 %v412, %v465
    %v517 = vadd.f32 %v413, %v465
    %v518 = vadd.f32 %v414, %v465
    %v519 = vadd.f32 %v415, %v470
    %v520 = vadd.f32 %v416, %v470
    %v521 = vadd.f32 %v417, %v470
    %v522 = vadd.f32 %v418, %v470
    %v523 = vadd.f32 %v419, %v470
    %v524 = vadd.f32 %v420, %v470
    %v525 = vadd.f32 %v421, %v470
    %v526 = vadd.f32 %v422, %v470
    %v527 = vadd.f32 %v423, %v475
    %v528 = vadd.f32 %v424, %v475
    %v529 = vadd.f32 %v425, %v475
    %v530 = vadd.f32 %v426, %v475
    %v531 = vadd.f32 %v427, %v475
    %v532 = vadd.f32 %v428, %v475
    %v533 = vadd.f32 %v429, %v475
    %v534 = vadd.f32 %v430, %v475
    %v535 = vadd.f32 %v431, %v480
    %v536 = vadd.f32 %v432, %v480
    %v537 = vadd.f32 %v433, %v480
    %v538 = vadd.f32 %v434, %v480
    %v539 = vadd.f32 %v435, %v480
    %v540 = vadd.f32 %v436, %v480
    %v541 = vadd.f32 %v437, %v480
    %v542 = vadd.f32 %v438, %v480
    %v543 = vadd.f32 %v439, %v485
    %v544 = vadd.f32 %v440, %v485
    %v545 = vadd.f32 %v441, %v485
    %v546 = vadd.f32 %v442, %v485
    %v547 = vadd.f32 %v443, %v485
    %v548 = vadd.f32 %v444, %v485
    %v549 = vadd.f32 %v445, %v485
    %v550 = vadd.f32 %v446, %v485
    %v551 = vld [vmem:[%s3] sm:$0xf]
    %v552 = vld [vmem:[%s3 + $0x4] sm:$0xf]
    %v553 = vld [vmem:[%s3 + $0x8] sm:$0xf]
    %v554 = vld [vmem:[%s3 + $0xc] sm:$0xf]
    %v555 = vmax.f32 %v519, 0.0
    %v556 = vmax.f32 %v520, 0.0
    %v557 = vmax.f32 %v521, 0.0
    %v558 = vmax.f32 %v522, 0.0
    %v559 = vmax.f32 %v523, 0.0
    %v560 = vmax.f32 %v524, 0.0
    %v561 = vmax.f32 %v525, 0.0
    %v562 = vmax.f32 %v526, 0.0
    %v563 = vmax.f32 %v527, 0.0
    %v564 = vmax.f32 %v528, 0.0
    %v565 = vmax.f32 %v529, 0.0
    %v566 = vmax.f32 %v530, 0.0
    %v567 = vmax.f32 %v531, 0.0
    %v568 = vmax.f32 %v532, 0.0
    %v569 = vmax.f32 %v533, 0.0
    %v570 = vmax.f32 %v534, 0.0
    %v571 = vmax.f32 %v535, 0.0
    %v572 = vmax.f32 %v536, 0.0
    %v573 = vmax.f32 %v537, 0.0
    %v574 = vmax.f32 %v538, 0.0
    %v575 = vmax.f32 %v539, 0.0
    %v576 = vmax.f32 %v540, 0.0
    %v577 = vmax.f32 %v541, 0.0
    %v578 = vmax.f32 %v542, 0.0
    %v579 = vmax.f32 %v543, 0.0
    %v580 = vmax.f32 %v544, 0.0
    %v581 = vmax.f32 %v545, 0.0
    %v582 = vmax.f32 %v546, 0.0
    %v583 = vmax.f32 %v547, 0.0
    %v584 = vmax.f32 %v548, 0.0
    %v585 = vmax.f32 %v549, 0.0
    %v586 = vmax.f32 %v550, 0.0
    %v587 = vpack.c.bf16 %v563, %v555
    %v588 = vpack.c.bf16 %v564, %v556
    %v589 = vpack.c.bf16 %v565, %v557
    %v590 = vpack.c.bf16 %v566, %v558
    %v591 = vpack.c.bf16 %v567, %v559
    %v592 = vpack.c.bf16 %v568, %v560
    %v593 = vpack.c.bf16 %v569, %v561
    %v594 = vpack.c.bf16 %v570, %v562
    %v595 = vpack.c.bf16 %v579, %v571
    %v596 = vpack.c.bf16 %v580, %v572
    %v597 = vpack.c.bf16 %v581, %v573
    %v598 = vpack.c.bf16 %v582, %v574
    %v599 = vpack.c.bf16 %v583, %v575
    %v600 = vpack.c.bf16 %v584, %v576
    %v601 = vpack.c.bf16 %v585, %v577
    %v602 = vpack.c.bf16 %v586, %v578
    %v603 = vld [vmem:[%s2 + $0x40] sm:$0xff]
    %v604 = vld [vmem:[%s2 + $0x48] sm:$0xff]
    %v605 = vld [vmem:[%s2 + $0x50] sm:$0xff]
    %v606 = vld [vmem:[%s2 + $0x58] sm:$0xff]
    %608 = vset.pattern.permute.xlu0 0
    %609 = vperm.xlu0 %608, %v603
    %v610 = vpop.permute.xlu0 %609
    %613 = vset.pattern.permute.xlu0 0
    %614 = vperm.xlu0 %613, %v604
    %v615 = vpop.permute.xlu0 %614
    %618 = vset.pattern.permute.xlu0 0
    %619 = vperm.xlu0 %618, %v605
    %v620 = vpop.permute.xlu0 %619
    %623 = vset.pattern.permute.xlu0 0
    %624 = vperm.xlu0 %623, %v606
    %v625 = vpop.permute.xlu0 %624
    %v631 = vunpack.c.l.b16 %v551
    %v632 = vunpack.c.l.b16 %v552
    %v633 = vunpack.c.l.b16 %v553
    %v634 = vunpack.c.l.b16 %v554
    %v635 = vpack.c.b16 %v632, %v631
    %v636 = vpack.c.b16 %v634, %v633
    %vm637 = vcmask 261120
    %v639 = vsel %vm637, %v635, 0
    %v642 = vsel %vm637, %v636, 0
    %644 = vmatprep.subr.bf16.mxu0 %v588
    %645 = vmatpush1.bf16.msra.mxu0 %v587
    %646 = vmatprep.subr.bf16.mxu0 %v596
    %647 = vmatpush1.bf16.msra.mxu0 %v595
    %648 = vmatprep.subr.bf16.mxu0 0
    %649 = vmatpush1.bf16.msra.mxu0 0
    %650 = vmatprep.subr.bf16.mxu0 0
    %651 = vmatpush1.bf16.msra.mxu0 0
    %652 = vmatprep.subr.bf16.mxu0 0
    %653 = vmatpush1.bf16.msra.mxu0 0
    %654 = vmatprep.subr.bf16.mxu0 0
    %655 = vmatpush1.bf16.msra.mxu0 0
    %656 = vmatprep.subr.bf16.mxu0 0
    %657 = vmatpush1.bf16.msra.mxu0 0
    %658 = vmatprep.subr.bf16.mxu0 0
    %659 = vmatpush1.bf16.msra.mxu0 0
    %660 = vmatprep.subr.bf16.mxu0 0
    %661 = vmatpush1.bf16.msra.mxu0 0
    %662 = vmatprep.subr.bf16.mxu0 0
    %663 = vmatpush1.bf16.msra.mxu0 0
    %664 = vmatprep.subr.bf16.mxu0 0
    %665 = vmatpush1.bf16.msra.mxu0 0
    %666 = vmatprep.subr.bf16.mxu0 0
    %667 = vmatpush1.bf16.msra.mxu0 0
    %668 = vmatprep.subr.bf16.mxu0 0
    %669 = vmatpush1.bf16.msra.mxu0 0
    %670 = vmatprep.subr.bf16.mxu0 0
    %671 = vmatpush1.bf16.msra.mxu0 0
    %672 = vmatprep.subr.bf16.mxu0 0
    %673 = vmatpush1.bf16.msra.mxu0 0
    %674 = vmatprep.subr.bf16.mxu0 0
    %675 = vmatpush1.bf16.msra.mxu0 0
    %676 = vmatprep.mubr.bf16.mxu0 0
    %677 = vmatmul.mubr.bf16.gmra.mrb[0].mxu0 %v639
    %v678 = vpop.f32.mrb[0].mxu0
    %v679 = vadd.f32 %v610, %v678
    %v680 = vpop.f32.mrb[0].mxu0
    %v681 = vadd.f32 %v610, %v680
    %v682 = vpop.f32.mrb[0].mxu0
    %v683 = vadd.f32 %v615, %v682
    %v684 = vpop.f32.mrb[0].mxu0
    %v685 = vadd.f32 %v615, %v684
    %686 = vmatprep.mubr.bf16.mxu0 0
    %687 = vmatmul.mubr.bf16.gmra.mrb[0].mxu0 %v642
    %v688 = vpop.f32.mrb[0].mxu0
    %v689 = vadd.f32 %v620, %v688
    %v690 = vpop.f32.mrb[0].mxu0
    %v691 = vadd.f32 %v620, %v690
    %v692 = vpop.f32.mrb[0].mxu0
    %v693 = vadd.f32 %v625, %v692
    %v694 = vpop.f32.mrb[0].mxu0
    %v695 = vadd.f32 %v625, %v694
    %696 = vdwg.mxu0
    %697 = vmatprep.subr.bf16.mxu0 %v590
    %698 = vmatpush1.bf16.msra.mxu0 %v589
    %699 = vmatprep.subr.bf16.mxu0 %v598
    %700 = vmatpush1.bf16.msra.mxu0 %v597
    %701 = vmatprep.subr.bf16.mxu0 0
    %702 = vmatpush1.bf16.msra.mxu0 0
    %703 = vmatprep.subr.bf16.mxu0 0
    %704 = vmatpush1.bf16.msra.mxu0 0
    %705 = vmatprep.subr.bf16.mxu0 0
    %706 = vmatpush1.bf16.msra.mxu0 0
    %707 = vmatprep.subr.bf16.mxu0 0
    %708 = vmatpush1.bf16.msra.mxu0 0
    %709 = vmatprep.subr.bf16.mxu0 0
    %710 = vmatpush1.bf16.msra.mxu0 0
    %711 = vmatprep.subr.bf16.mxu0 0
    %712 = vmatpush1.bf16.msra.mxu0 0
    %713 = vmatprep.subr.bf16.mxu0 0
    %714 = vmatpush1.bf16.msra.mxu0 0
    %715 = vmatprep.subr.bf16.mxu0 0
    %716 = vmatpush1.bf16.msra.mxu0 0
    %717 = vmatprep.subr.bf16.mxu0 0
    %718 = vmatpush1.bf16.msra.mxu0 0
    %719 = vmatprep.subr.bf16.mxu0 0
    %720 = vmatpush1.bf16.msra.mxu0 0
    %721 = vmatprep.subr.bf16.mxu0 0
    %722 = vmatpush1.bf16.msra.mxu0 0
    %723 = vmatprep.subr.bf16.mxu0 0
    %724 = vmatpush1.bf16.msra.mxu0 0
    %725 = vmatprep.subr.bf16.mxu0 0
    %726 = vmatpush1.bf16.msra.mxu0 0
    %727 = vmatprep.subr.bf16.mxu0 0
    %728 = vmatpush1.bf16.msra.mxu0 0
    %729 = vmatprep.mubr.bf16.mxu0 0
    %730 = vmatmul.mubr.bf16.gmra.mrb[0].mxu0 %v639
    %v731 = vpop.f32.mrb[0].mxu0
    %v732 = vadd.f32 %v610, %v731
    %v733 = vpop.f32.mrb[0].mxu0
    %v734 = vadd.f32 %v610, %v733
    %v735 = vpop.f32.mrb[0].mxu0
    %v736 = vadd.f32 %v615, %v735
    %v737 = vpop.f32.mrb[0].mxu0
    %v738 = vadd.f32 %v615, %v737
    %739 = vmatprep.mubr.bf16.mxu0 0
    %740 = vmatmul.mubr.bf16.gmra.mrb[0].mxu0 %v642
    %v741 = vpop.f32.mrb[0].mxu0
    %v742 = vadd.f32 %v620, %v741
    %v743 = vpop.f32.mrb[0].mxu0
    %v744 = vadd.f32 %v620, %v743
    %v745 = vpop.f32.mrb[0].mxu0
    %v746 = vadd.f32 %v625, %v745
    %v747 = vpop.f32.mrb[0].mxu0
    %v748 = vadd.f32 %v625, %v747
    %749 = vdwg.mxu0
    %750 = vmatprep.subr.bf16.mxu0 %v592
    %751 = vmatpush1.bf16.msra.mxu0 %v591
    %752 = vmatprep.subr.bf16.mxu0 %v600
    %753 = vmatpush1.bf16.msra.mxu0 %v599
    %754 = vmatprep.subr.bf16.mxu0 0
    %755 = vmatpush1.bf16.msra.mxu0 0
    %756 = vmatprep.subr.bf16.mxu0 0
    %757 = vmatpush1.bf16.msra.mxu0 0
    %758 = vmatprep.subr.bf16.mxu0 0
    %759 = vmatpush1.bf16.msra.mxu0 0
    %760 = vmatprep.subr.bf16.mxu0 0
    %761 = vmatpush1.bf16.msra.mxu0 0
    %762 = vmatprep.subr.bf16.mxu0 0
    %763 = vmatpush1.bf16.msra.mxu0 0
    %764 = vmatprep.subr.bf16.mxu0 0
    %765 = vmatpush1.bf16.msra.mxu0 0
    %766 = vmatprep.subr.bf16.mxu0 0
    %767 = vmatpush1.bf16.msra.mxu0 0
    %768 = vmatprep.subr.bf16.mxu0 0
    %769 = vmatpush1.bf16.msra.mxu0 0
    %770 = vmatprep.subr.bf16.mxu0 0
    %771 = vmatpush1.bf16.msra.mxu0 0
    %772 = vmatprep.subr.bf16.mxu0 0
    %773 = vmatpush1.bf16.msra.mxu0 0
    %774 = vmatprep.subr.bf16.mxu0 0
    %775 = vmatpush1.bf16.msra.mxu0 0
    %776 = vmatprep.subr.bf16.mxu0 0
    %777 = vmatpush1.bf16.msra.mxu0 0
    %778 = vmatprep.subr.bf16.mxu0 0
    %779 = vmatpush1.bf16.msra.mxu0 0
    %780 = vmatprep.subr.bf16.mxu0 0
    %781 = vmatpush1.bf16.msra.mxu0 0
    %782 = vmatprep.mubr.bf16.mxu0 0
    %783 = vmatmul.mubr.bf16.gmra.mrb[0].mxu0 %v639
    %v784 = vpop.f32.mrb[0].mxu0
    %v785 = vadd.f32 %v610, %v784
    %v786 = vpop.f32.mrb[0].mxu0
    %v787 = vadd.f32 %v610, %v786
    %v788 = vpop.f32.mrb[0].mxu0
    %v789 = vadd.f32 %v615, %v788
    %v790 = vpop.f32.mrb[0].mxu0
    %v791 = vadd.f32 %v615, %v790
    %792 = vmatprep.mubr.bf16.mxu0 0
    %793 = vmatmul.mubr.bf16.gmra.mrb[0].mxu0 %v642
    %v794 = vpop.f32.mrb[0].mxu0
    %v795 = vadd.f32 %v620, %v794
    %v796 = vpop.f32.mrb[0].mxu0
    %v797 = vadd.f32 %v620, %v796
    %v798 = vpop.f32.mrb[0].mxu0
    %v799 = vadd.f32 %v625, %v798
    %v800 = vpop.f32.mrb[0].mxu0
    %v801 = vadd.f32 %v625, %v800
    %802 = vdwg.mxu0
    %803 = vmatprep.subr.bf16.mxu0 %v594
    %804 = vmatpush1.bf16.msra.mxu0 %v593
    %805 = vmatprep.subr.bf16.mxu0 %v602
    %806 = vmatpush1.bf16.msra.mxu0 %v601
    %807 = vmatprep.subr.bf16.mxu0 0
    %808 = vmatpush1.bf16.msra.mxu0 0
    %809 = vmatprep.subr.bf16.mxu0 0
    %810 = vmatpush1.bf16.msra.mxu0 0
    %811 = vmatprep.subr.bf16.mxu0 0
    %812 = vmatpush1.bf16.msra.mxu0 0
    %813 = vmatprep.subr.bf16.mxu0 0
    %814 = vmatpush1.bf16.msra.mxu0 0
    %815 = vmatprep.subr.bf16.mxu0 0
    %816 = vmatpush1.bf16.msra.mxu0 0
    %817 = vmatprep.subr.bf16.mxu0 0
    %818 = vmatpush1.bf16.msra.mxu0 0
    %819 = vmatprep.subr.bf16.mxu0 0
    %820 = vmatpush1.bf16.msra.mxu0 0
    %821 = vmatprep.subr.bf16.mxu0 0
    %822 = vmatpush1.bf16.msra.mxu0 0
    %823 = vmatprep.subr.bf16.mxu0 0
    %824 = vmatpush1.bf16.msra.mxu0 0
    %825 = vmatprep.subr.bf16.mxu0 0
    %826 = vmatpush1.bf16.msra.mxu0 0
    %827 = vmatprep.subr.bf16.mxu0 0
    %828 = vmatpush1.bf16.msra.mxu0 0
    %829 = vmatprep.subr.bf16.mxu0 0
    %830 = vmatpush1.bf16.msra.mxu0 0
    %831 = vmatprep.subr.bf16.mxu0 0
    %832 = vmatpush1.bf16.msra.mxu0 0
    %833 = vmatprep.subr.bf16.mxu0 0
    %834 = vmatpush1.bf16.msra.mxu0 0
    %835 = vmatprep.mubr.bf16.mxu0 0
    %836 = vmatmul.mubr.bf16.gmra.mrb[0].mxu0 %v639
    %v837 = vpop.f32.mrb[0].mxu0
    %v838 = vadd.f32 %v610, %v837
    %v839 = vpop.f32.mrb[0].mxu0
    %v840 = vadd.f32 %v610, %v839
    %v841 = vpop.f32.mrb[0].mxu0
    %v842 = vadd.f32 %v615, %v841
    %v843 = vpop.f32.mrb[0].mxu0
    %v844 = vadd.f32 %v615, %v843
    %845 = vmatprep.mubr.bf16.mxu0 0
    %846 = vmatmul.mubr.bf16.gmra.mrb[0].mxu0 %v642
    %v847 = vpop.f32.mrb[0].mxu0
    %v848 = vadd.f32 %v620, %v847
    %v849 = vpop.f32.mrb[0].mxu0
    %v850 = vadd.f32 %v620, %v849
    %v851 = vpop.f32.mrb[0].mxu0
    %v852 = vadd.f32 %v625, %v851
    %v853 = vpop.f32.mrb[0].mxu0
    %v854 = vadd.f32 %v625, %v853
    %855 = vdwg.mxu0
    %v856 = vadd.f32 %v487, %v679
    %v857 = vadd.f32 %v488, %v681
    %v858 = vadd.f32 %v489, %v732
    %v859 = vadd.f32 %v490, %v734
    %v860 = vadd.f32 %v491, %v785
    %v861 = vadd.f32 %v492, %v787
    %v862 = vadd.f32 %v493, %v838
    %v863 = vadd.f32 %v494, %v840
    %v864 = vadd.f32 %v495, %v683
    %v865 = vadd.f32 %v496, %v685
    %v866 = vadd.f32 %v497, %v736
    %v867 = vadd.f32 %v498, %v738
    %v868 = vadd.f32 %v499, %v789
    %v869 = vadd.f32 %v500, %v791
    %v870 = vadd.f32 %v501, %v842
    %v871 = vadd.f32 %v502, %v844
    %v872 = vadd.f32 %v503, %v689
    %v873 = vadd.f32 %v504, %v691
    %v874 = vadd.f32 %v505, %v742
    %v875 = vadd.f32 %v506, %v744
    %v876 = vadd.f32 %v507, %v795
    %v877 = vadd.f32 %v508, %v797
    %v878 = vadd.f32 %v509, %v848
    %v879 = vadd.f32 %v510, %v850
    %v880 = vadd.f32 %v511, %v693
    %v881 = vadd.f32 %v512, %v695
    %v882 = vadd.f32 %v513, %v746
    %v883 = vadd.f32 %v514, %v748
    %v884 = vadd.f32 %v515, %v799
    %v885 = vadd.f32 %v516, %v801
    %v886 = vadd.f32 %v517, %v852
    %v887 = vadd.f32 %v518, %v854
    %v888 = vtanh.pop %v856
    %v889 = vtanh.pop %v857
    %v890 = vtanh.pop %v858
    %v891 = vtanh.pop %v859
    %v892 = vtanh.pop %v860
    %v893 = vtanh.pop %v861
    %v894 = vtanh.pop %v862
    %v895 = vtanh.pop %v863
    %v896 = vtanh.pop %v864
    %v897 = vtanh.pop %v865
    %v898 = vtanh.pop %v866
    %v899 = vtanh.pop %v867
    %v900 = vtanh.pop %v868
    %v901 = vtanh.pop %v869
    %v902 = vtanh.pop %v870
    %v903 = vtanh.pop %v871
    %v904 = vtanh.pop %v872
    %v905 = vtanh.pop %v873
    %v906 = vtanh.pop %v874
    %v907 = vtanh.pop %v875
    %v908 = vtanh.pop %v876
    %v909 = vtanh.pop %v877
    %v910 = vtanh.pop %v878
    %v911 = vtanh.pop %v879
    %v912 = vtanh.pop %v880
    %v913 = vtanh.pop %v881
    %v914 = vtanh.pop %v882
    %v915 = vtanh.pop %v883
    %v916 = vtanh.pop %v884
    %v917 = vtanh.pop %v885
    %v918 = vtanh.pop %v886
    %v919 = vtanh.pop %v887
    %v920 = vld [vmem:[%s2 + $0x60] sm:$0xff]
    %v921 = vld [vmem:[%s2 + $0x68] sm:$0xff]
    %v922 = vld [vmem:[%s2 + $0x70] sm:$0xff]
    %v923 = vld [vmem:[%s2 + $0x78] sm:$0xff]
    %v924 = vld [vmem:[%s2 + $0x80] sm:$0xff]
    %v925 = vld [vmem:[%s2 + $0x88] sm:$0xff]
    %v926 = vld [vmem:[%s2 + $0x90] sm:$0xff]
    %v927 = vld [vmem:[%s2 + $0x98] sm:$0xff]
    %v928 = vld [vmem:[%s3 + $0x20] sm:$0xf]
    %v929 = vld [vmem:[%s3 + $0x24] sm:$0xf]
    %v930 = vld [vmem:[%s3 + $0x28] sm:$0xf]
    %v931 = vld [vmem:[%s3 + $0x2c] sm:$0xf]
    %v932 = vld [vmem:[%s3 + $0x30] sm:$0xf]
    %v933 = vld [vmem:[%s3 + $0x34] sm:$0xf]
    %v934 = vld [vmem:[%s3 + $0x38] sm:$0xf]
    %v935 = vld [vmem:[%s3 + $0x3c] sm:$0xf]
    %v936 = vpack.c.bf16 %v896, %v888
    %v937 = vpack.c.bf16 %v897, %v889
    %v938 = vpack.c.bf16 %v898, %v890
    %v939 = vpack.c.bf16 %v899, %v891
    %v940 = vpack.c.bf16 %v900, %v892
    %v941 = vpack.c.bf16 %v901, %v893
    %v942 = vpack.c.bf16 %v902, %v894
    %v943 = vpack.c.bf16 %v903, %v895
    %v944 = vpack.c.bf16 %v912, %v904
    %v945 = vpack.c.bf16 %v913, %v905
    %v946 = vpack.c.bf16 %v914, %v906
    %v947 = vpack.c.bf16 %v915, %v907
    %v948 = vpack.c.bf16 %v916, %v908
    %v949 = vpack.c.bf16 %v917, %v909
    %v950 = vpack.c.bf16 %v918, %v910
    %v951 = vpack.c.bf16 %v919, %v911
    %953 = vset.pattern.permute.xlu0 0
    %954 = vperm.xlu0 %953, %v920
    %v955 = vpop.permute.xlu0 %954
    %958 = vset.pattern.permute.xlu0 0
    %959 = vperm.xlu0 %958, %v921
    %v960 = vpop.permute.xlu0 %959
    %963 = vset.pattern.permute.xlu0 0
    %964 = vperm.xlu0 %963, %v922
    %v965 = vpop.permute.xlu0 %964
    %968 = vset.pattern.permute.xlu0 0
    %969 = vperm.xlu0 %968, %v923
    %v970 = vpop.permute.xlu0 %969
    %973 = vset.pattern.permute.xlu0 0
    %974 = vperm.xlu0 %973, %v924
    %v975 = vpop.permute.xlu0 %974
    %978 = vset.pattern.permute.xlu0 0
    %979 = vperm.xlu0 %978, %v925
    %v980 = vpop.permute.xlu0 %979
    %983 = vset.pattern.permute.xlu0 0
    %984 = vperm.xlu0 %983, %v926
    %v985 = vpop.permute.xlu0 %984
    %988 = vset.pattern.permute.xlu0 0
    %989 = vperm.xlu0 %988, %v927
    %v990 = vpop.permute.xlu0 %989
    %v1000 = vunpack.c.l.b16 %v928
    %v1001 = vunpack.c.l.b16 %v929
    %v1002 = vunpack.c.l.b16 %v930
    %v1003 = vunpack.c.l.b16 %v931
    %v1004 = vunpack.c.l.b16 %v932
    %v1005 = vunpack.c.l.b16 %v933
    %v1006 = vunpack.c.l.b16 %v934
    %v1007 = vunpack.c.l.b16 %v935
    %v1008 = vpack.c.b16 %v1001, %v1000
    %v1009 = vpack.c.b16 %v1003, %v1002
    %v1010 = vpack.c.b16 %v1005, %v1004
    %v1011 = vpack.c.b16 %v1007, %v1006
    %v1013 = vsel %vm637, %v1008, 0
    %v1016 = vsel %vm637, %v1009, 0
    %v1019 = vsel %vm637, %v1010, 0
    %v1022 = vsel %vm637, %v1011, 0
    %1024 = vmatprep.subr.bf16.mxu0 %v937
    %1025 = vmatpush1.bf16.msra.mxu0 %v936
    %1026 = vmatprep.subr.bf16.mxu0 %v945
    %1027 = vmatpush1.bf16.msra.mxu0 %v944
    %1028 = vmatprep.subr.bf16.mxu0 0
    %1029 = vmatpush1.bf16.msra.mxu0 0
    %1030 = vmatprep.subr.bf16.mxu0 0
    %1031 = vmatpush1.bf16.msra.mxu0 0
    %1032 = vmatprep.subr.bf16.mxu0 0
    %1033 = vmatpush1.bf16.msra.mxu0 0
    %1034 = vmatprep.subr.bf16.mxu0 0
    %1035 = vmatpush1.bf16.msra.mxu0 0
    %1036 = vmatprep.subr.bf16.mxu0 0
    %1037 = vmatpush1.bf16.msra.mxu0 0
    %1038 = vmatprep.subr.bf16.mxu0 0
    %1039 = vmatpush1.bf16.msra.mxu0 0
    %1040 = vmatprep.subr.bf16.mxu0 0
    %1041 = vmatpush1.bf16.msra.mxu0 0
    %1042 = vmatprep.subr.bf16.mxu0 0
    %1043 = vmatpush1.bf16.msra.mxu0 0
    %1044 = vmatprep.subr.bf16.mxu0 0
    %1045 = vmatpush1.bf16.msra.mxu0 0
    %1046 = vmatprep.subr.bf16.mxu0 0
    %1047 = vmatpush1.bf16.msra.mxu0 0
    %1048 = vmatprep.subr.bf16.mxu0 0
    %1049 = vmatpush1.bf16.msra.mxu0 0
    %1050 = vmatprep.subr.bf16.mxu0 0
    %1051 = vmatpush1.bf16.msra.mxu0 0
    %1052 = vmatprep.subr.bf16.mxu0 0
    %1053 = vmatpush1.bf16.msra.mxu0 0
    %1054 = vmatprep.subr.bf16.mxu0 0
    %1055 = vmatpush1.bf16.msra.mxu0 0
    %1056 = vmatprep.mubr.bf16.mxu0 0
    %1057 = vmatmul.mubr.bf16.gmra.mrb[0].mxu0 %v1013
    %v1058 = vpop.f32.mrb[0].mxu0
    %v1059 = vadd.f32 %v955, %v1058
    %v1060 = vpop.f32.mrb[0].mxu0
    %v1061 = vadd.f32 %v955, %v1060
    %v1062 = vpop.f32.mrb[0].mxu0
    %v1063 = vadd.f32 %v960, %v1062
    %v1064 = vpop.f32.mrb[0].mxu0
    %v1065 = vadd.f32 %v960, %v1064
    %1066 = vmatprep.mubr.bf16.mxu0 0
    %1067 = vmatmul.mubr.bf16.gmra.mrb[0].mxu0 %v1016
    %v1068 = vpop.f32.mrb[0].mxu0
    %v1069 = vadd.f32 %v965, %v1068
    %v1070 = vpop.f32.mrb[0].mxu0
    %v1071 = vadd.f32 %v965, %v1070
    %v1072 = vpop.f32.mrb[0].mxu0
    %v1073 = vadd.f32 %v970, %v1072
    %v1074 = vpop.f32.mrb[0].mxu0
    %v1075 = vadd.f32 %v970, %v1074
    %1076 = vmatprep.mubr.bf16.mxu0 0
    %1077 = vmatmul.mubr.bf16.gmra.mrb[0].mxu0 %v1019
    %v1078 = vpop.f32.mrb[0].mxu0
    %v1079 = vadd.f32 %v975, %v1078
    %v1080 = vpop.f32.mrb[0].mxu0
    %v1081 = vadd.f32 %v975, %v1080
    %v1082 = vpop.f32.mrb[0].mxu0
    %v1083 = vadd.f32 %v980, %v1082
    %v1084 = vpop.f32.mrb[0].mxu0
    %v1085 = vadd.f32 %v980, %v1084
    %1086 = vmatprep.mubr.bf16.mxu0 0
    %1087 = vmatmul.mubr.bf16.gmra.mrb[0].mxu0 %v1022
    %v1088 = vpop.f32.mrb[0].mxu0
    %v1089 = vadd.f32 %v985, %v1088
    %v1090 = vpop.f32.mrb[0].mxu0
    %v1091 = vadd.f32 %v985, %v1090
    %v1092 = vpop.f32.mrb[0].mxu0
    %v1093 = vadd.f32 %v990, %v1092
    %v1094 = vpop.f32.mrb[0].mxu0
    %v1095 = vadd.f32 %v990, %v1094
    %1096 = vdwg.mxu0
    %1097 = vmatprep.subr.bf16.mxu0 %v939
    %1098 = vmatpush1.bf16.msra.mxu0 %v938
    %1099 = vmatprep.subr.bf16.mxu0 %v947
    %1100 = vmatpush1.bf16.msra.mxu0 %v946
    %1101 = vmatprep.subr.bf16.mxu0 0
    %1102 = vmatpush1.bf16.msra.mxu0 0
    %1103 = vmatprep.subr.bf16.mxu0 0
    %1104 = vmatpush1.bf16.msra.mxu0 0
    %1105 = vmatprep.subr.bf16.mxu0 0
    %1106 = vmatpush1.bf16.msra.mxu0 0
    %1107 = vmatprep.subr.bf16.mxu0 0
    %1108 = vmatpush1.bf16.msra.mxu0 0
    %1109 = vmatprep.subr.bf16.mxu0 0
    %1110 = vmatpush1.bf16.msra.mxu0 0
    %1111 = vmatprep.subr.bf16.mxu0 0
    %1112 = vmatpush1.bf16.msra.mxu0 0
    %1113 = vmatprep.subr.bf16.mxu0 0
    %1114 = vmatpush1.bf16.msra.mxu0 0
    %1115 = vmatprep.subr.bf16.mxu0 0
    %1116 = vmatpush1.bf16.msra.mxu0 0
    %1117 = vmatprep.subr.bf16.mxu0 0
    %1118 = vmatpush1.bf16.msra.mxu0 0
    %1119 = vmatprep.subr.bf16.mxu0 0
    %1120 = vmatpush1.bf16.msra.mxu0 0
    %1121 = vmatprep.subr.bf16.mxu0 0
    %1122 = vmatpush1.bf16.msra.mxu0 0
    %1123 = vmatprep.subr.bf16.mxu0 0
    %1124 = vmatpush1.bf16.msra.mxu0 0
    %1125 = vmatprep.subr.bf16.mxu0 0
    %1126 = vmatpush1.bf16.msra.mxu0 0
    %1127 = vmatprep.subr.bf16.mxu0 0
    %1128 = vmatpush1.bf16.msra.mxu0 0
    %1129 = vmatprep.mubr.bf16.mxu0 0
    %1130 = vmatmul.mubr.bf16.gmra.mrb[0].mxu0 %v1013
    %v1131 = vpop.f32.mrb[0].mxu0
    %v1132 = vadd.f32 %v955, %v1131
    %v1133 = vpop.f32.mrb[0].mxu0
    %v1134 = vadd.f32 %v955, %v1133
    %v1135 = vpop.f32.mrb[0].mxu0
    %v1136 = vadd.f32 %v960, %v1135
    %v1137 = vpop.f32.mrb[0].mxu0
    %v1138 = vadd.f32 %v960, %v1137
    %1139 = vmatprep.mubr.bf16.mxu0 0
    %1140 = vmatmul.mubr.bf16.gmra.mrb[0].mxu0 %v1016
    %v1141 = vpop.f32.mrb[0].mxu0
    %v1142 = vadd.f32 %v965, %v1141
    %v1143 = vpop.f32.mrb[0].mxu0
    %v1144 = vadd.f32 %v965, %v1143
    %v1145 = vpop.f32.mrb[0].mxu0
    %v1146 = vadd.f32 %v970, %v1145
    %v1147 = vpop.f32.mrb[0].mxu0
    %v1148 = vadd.f32 %v970, %v1147
    %1149 = vmatprep.mubr.bf16.mxu0 0
    %1150 = vmatmul.mubr.bf16.gmra.mrb[0].mxu0 %v1019
    %v1151 = vpop.f32.mrb[0].mxu0
    %v1152 = vadd.f32 %v975, %v1151
    %v1153 = vpop.f32.mrb[0].mxu0
    %v1154 = vadd.f32 %v975, %v1153
    %v1155 = vpop.f32.mrb[0].mxu0
    %v1156 = vadd.f32 %v980, %v1155
    %v1157 = vpop.f32.mrb[0].mxu0
    %v1158 = vadd.f32 %v980, %v1157
    %1159 = vmatprep.mubr.bf16.mxu0 0
    %1160 = vmatmul.mubr.bf16.gmra.mrb[0].mxu0 %v1022
    %v1161 = vpop.f32.mrb[0].mxu0
    %v1162 = vadd.f32 %v985, %v1161
    %v1163 = vpop.f32.mrb[0].mxu0
    %v1164 = vadd.f32 %v985, %v1163
    %v1165 = vpop.f32.mrb[0].mxu0
    %v1166 = vadd.f32 %v990, %v1165
    %v1167 = vpop.f32.mrb[0].mxu0
    %v1168 = vadd.f32 %v990, %v1167
    %1169 = vdwg.mxu0
    %1170 = vmatprep.subr.bf16.mxu0 %v941
    %1171 = vmatpush1.bf16.msra.mxu0 %v940
    %1172 = vmatprep.subr.bf16.mxu0 %v949
    %1173 = vmatpush1.bf16.msra.mxu0 %v948
    %1174 = vmatprep.subr.bf16.mxu0 0
    %1175 = vmatpush1.bf16.msra.mxu0 0
    %1176 = vmatprep.subr.bf16.mxu0 0
    %1177 = vmatpush1.bf16.msra.mxu0 0
    %1178 = vmatprep.subr.bf16.mxu0 0
    %1179 = vmatpush1.bf16.msra.mxu0 0
    %1180 = vmatprep.subr.bf16.mxu0 0
    %1181 = vmatpush1.bf16.msra.mxu0 0
    %1182 = vmatprep.subr.bf16.mxu0 0
    %1183 = vmatpush1.bf16.msra.mxu0 0
    %1184 = vmatprep.subr.bf16.mxu0 0
    %1185 = vmatpush1.bf16.msra.mxu0 0
    %1186 = vmatprep.subr.bf16.mxu0 0
    %1187 = vmatpush1.bf16.msra.mxu0 0
    %1188 = vmatprep.subr.bf16.mxu0 0
    %1189 = vmatpush1.bf16.msra.mxu0 0
    %1190 = vmatprep.subr.bf16.mxu0 0
    %1191 = vmatpush1.bf16.msra.mxu0 0
    %1192 = vmatprep.subr.bf16.mxu0 0
    %1193 = vmatpush1.bf16.msra.mxu0 0
    %1194 = vmatprep.subr.bf16.mxu0 0
    %1195 = vmatpush1.bf16.msra.mxu0 0
    %1196 = vmatprep.subr.bf16.mxu0 0
    %1197 = vmatpush1.bf16.msra.mxu0 0
    %1198 = vmatprep.subr.bf16.mxu0 0
    %1199 = vmatpush1.bf16.msra.mxu0 0
    %1200 = vmatprep.subr.bf16.mxu0 0
    %1201 = vmatpush1.bf16.msra.mxu0 0
    %1202 = vmatprep.mubr.bf16.mxu0 0
    %1203 = vmatmul.mubr.bf16.gmra.mrb[0].mxu0 %v1013
    %v1204 = vpop.f32.mrb[0].mxu0
    %v1205 = vadd.f32 %v955, %v1204
    %v1206 = vpop.f32.mrb[0].mxu0
    %v1207 = vadd.f32 %v955, %v1206
    %v1208 = vpop.f32.mrb[0].mxu0
    %v1209 = vadd.f32 %v960, %v1208
    %v1210 = vpop.f32.mrb[0].mxu0
    %v1211 = vadd.f32 %v960, %v1210
    %1212 = vmatprep.mubr.bf16.mxu0 0
    %1213 = vmatmul.mubr.bf16.gmra.mrb[0].mxu0 %v1016
    %v1214 = vpop.f32.mrb[0].mxu0
    %v1215 = vadd.f32 %v965, %v1214
    %v1216 = vpop.f32.mrb[0].mxu0
    %v1217 = vadd.f32 %v965, %v1216
    %v1218 = vpop.f32.mrb[0].mxu0
    %v1219 = vadd.f32 %v970, %v1218
    %v1220 = vpop.f32.mrb[0].mxu0
    %v1221 = vadd.f32 %v970, %v1220
    %1222 = vmatprep.mubr.bf16.mxu0 0
    %1223 = vmatmul.mubr.bf16.gmra.mrb[0].mxu0 %v1019
    %v1224 = vpop.f32.mrb[0].mxu0
    %v1225 = vadd.f32 %v975, %v1224
    %v1226 = vpop.f32.mrb[0].mxu0
    %v1227 = vadd.f32 %v975, %v1226
    %v1228 = vpop.f32.mrb[0].mxu0
    %v1229 = vadd.f32 %v980, %v1228
    %v1230 = vpop.f32.mrb[0].mxu0
    %v1231 = vadd.f32 %v980, %v1230
    %1232 = vmatprep.mubr.bf16.mxu0 0
    %1233 = vmatmul.mubr.bf16.gmra.mrb[0].mxu0 %v1022
    %v1234 = vpop.f32.mrb[0].mxu0
    %v1235 = vadd.f32 %v985, %v1234
    %v1236 = vpop.f32.mrb[0].mxu0
    %v1237 = vadd.f32 %v985, %v1236
    %v1238 = vpop.f32.mrb[0].mxu0
    %v1239 = vadd.f32 %v990, %v1238
    %v1240 = vpop.f32.mrb[0].mxu0
    %v1241 = vadd.f32 %v990, %v1240
    %1242 = vdwg.mxu0
    %1243 = vmatprep.subr.bf16.mxu0 %v943
    %1244 = vmatpush1.bf16.msra.mxu0 %v942
    %1245 = vmatprep.subr.bf16.mxu0 %v951
    %1246 = vmatpush1.bf16.msra.mxu0 %v950
    %1247 = vmatprep.subr.bf16.mxu0 0
    %1248 = vmatpush1.bf16.msra.mxu0 0
    %1249 = vmatprep.subr.bf16.mxu0 0
    %1250 = vmatpush1.bf16.msra.mxu0 0
    %1251 = vmatprep.subr.bf16.mxu0 0
    %1252 = vmatpush1.bf16.msra.mxu0 0
    %1253 = vmatprep.subr.bf16.mxu0 0
    %1254 = vmatpush1.bf16.msra.mxu0 0
    %1255 = vmatprep.subr.bf16.mxu0 0
    %1256 = vmatpush1.bf16.msra.mxu0 0
    %1257 = vmatprep.subr.bf16.mxu0 0
    %1258 = vmatpush1.bf16.msra.mxu0 0
    %1259 = vmatprep.subr.bf16.mxu0 0
    %1260 = vmatpush1.bf16.msra.mxu0 0
    %1261 = vmatprep.subr.bf16.mxu0 0
    %1262 = vmatpush1.bf16.msra.mxu0 0
    %1263 = vmatprep.subr.bf16.mxu0 0
    %1264 = vmatpush1.bf16.msra.mxu0 0
    %1265 = vmatprep.subr.bf16.mxu0 0
    %1266 = vmatpush1.bf16.msra.mxu0 0
    %1267 = vmatprep.subr.bf16.mxu0 0
    %1268 = vmatpush1.bf16.msra.mxu0 0
    %1269 = vmatprep.subr.bf16.mxu0 0
    %1270 = vmatpush1.bf16.msra.mxu0 0
    %1271 = vmatprep.subr.bf16.mxu0 0
    %1272 = vmatpush1.bf16.msra.mxu0 0
    %1273 = vmatprep.subr.bf16.mxu0 0
    %1274 = vmatpush1.bf16.msra.mxu0 0
    %1275 = vmatprep.mubr.bf16.mxu0 0
    %1276 = vmatmul.mubr.bf16.gmra.mrb[0].mxu0 %v1013
    %v1277 = vpop.f32.mrb[0].mxu0
    %v1278 = vadd.f32 %v955, %v1277
    %v1279 = vpop.f32.mrb[0].mxu0
    %v1280 = vadd.f32 %v955, %v1279
    %v1281 = vpop.f32.mrb[0].mxu0
    %v1282 = vadd.f32 %v960, %v1281
    %v1283 = vpop.f32.mrb[0].mxu0
    %v1284 = vadd.f32 %v960, %v1283
    %1285 = vmatprep.mubr.bf16.mxu0 0
    %1286 = vmatmul.mubr.bf16.gmra.mrb[0].mxu0 %v1016
    %v1287 = vpop.f32.mrb[0].mxu0
    %v1288 = vadd.f32 %v965, %v1287
    %v1289 = vpop.f32.mrb[0].mxu0
    %v1290 = vadd.f32 %v965, %v1289
    %v1291 = vpop.f32.mrb[0].mxu0
    %v1292 = vadd.f32 %v970, %v1291
    %v1293 = vpop.f32.mrb[0].mxu0
    %v1294 = vadd.f32 %v970, %v1293
    %1295 = vmatprep.mubr.bf16.mxu0 0
    %1296 = vmatmul.mubr.bf16.gmra.mrb[0].mxu0 %v1019
    %v1297 = vpop.f32.mrb[0].mxu0
    %v1298 = vadd.f32 %v975, %v1297
    %v1299 = vpop.f32.mrb[0].mxu0
    %v1300 = vadd.f32 %v975, %v1299
    %v1301 = vpop.f32.mrb[0].mxu0
    %v1302 = vadd.f32 %v980, %v1301
    %v1303 = vpop.f32.mrb[0].mxu0
    %v1304 = vadd.f32 %v980, %v1303
    %1305 = vmatprep.mubr.bf16.mxu0 0
    %1306 = vmatmul.mubr.bf16.gmra.mrb[0].mxu0 %v1022
    %v1307 = vpop.f32.mrb[0].mxu0
    %v1308 = vadd.f32 %v985, %v1307
    %v1309 = vpop.f32.mrb[0].mxu0
    %v1310 = vadd.f32 %v985, %v1309
    %v1311 = vpop.f32.mrb[0].mxu0
    %v1312 = vadd.f32 %v990, %v1311
    %v1313 = vpop.f32.mrb[0].mxu0
    %v1314 = vadd.f32 %v990, %v1313
    %1315 = vdwg.mxu0
    %v1316 = vld [vmem:[%s3 + $0x10] sm:$0xf]
    %v1317 = vld [vmem:[%s3 + $0x14] sm:$0xf]
    %v1318 = vld [vmem:[%s3 + $0x18] sm:$0xf]
    %v1319 = vld [vmem:[%s3 + $0x1c] sm:$0xf]
    %v1320 = vmax.f32 %v1079, 0.0
    %v1321 = vmax.f32 %v1081, 0.0
    %v1322 = vmax.f32 %v1152, 0.0
    %v1323 = vmax.f32 %v1154, 0.0
    %v1324 = vmax.f32 %v1225, 0.0
    %v1325 = vmax.f32 %v1227, 0.0
    %v1326 = vmax.f32 %v1298, 0.0
    %v1327 = vmax.f32 %v1300, 0.0
    %v1328 = vmax.f32 %v1083, 0.0
    %v1329 = vmax.f32 %v1085, 0.0
    %v1330 = vmax.f32 %v1156, 0.0
    %v1331 = vmax.f32 %v1158, 0.0
    %v1332 = vmax.f32 %v1229, 0.0
    %v1333 = vmax.f32 %v1231, 0.0
    %v1334 = vmax.f32 %v1302, 0.0
    %v1335 = vmax.f32 %v1304, 0.0
    %v1336 = vmax.f32 %v1089, 0.0
    %v1337 = vmax.f32 %v1091, 0.0
    %v1338 = vmax.f32 %v1162, 0.0
    %v1339 = vmax.f32 %v1164, 0.0
    %v1340 = vmax.f32 %v1235, 0.0
    %v1341 = vmax.f32 %v1237, 0.0
    %v1342 = vmax.f32 %v1308, 0.0
    %v1343 = vmax.f32 %v1310, 0.0
    %v1344 = vmax.f32 %v1093, 0.0
    %v1345 = vmax.f32 %v1095, 0.0
    %v1346 = vmax.f32 %v1166, 0.0
    %v1347 = vmax.f32 %v1168, 0.0
    %v1348 = vmax.f32 %v1239, 0.0
    %v1349 = vmax.f32 %v1241, 0.0
    %v1350 = vmax.f32 %v1312, 0.0
    %v1351 = vmax.f32 %v1314, 0.0
    %v1352 = vpack.c.bf16 %v1328, %v1320
    %v1353 = vpack.c.bf16 %v1329, %v1321
    %v1354 = vpack.c.bf16 %v1330, %v1322
    %v1355 = vpack.c.bf16 %v1331, %v1323
    %v1356 = vpack.c.bf16 %v1332, %v1324
    %v1357 = vpack.c.bf16 %v1333, %v1325
    %v1358 = vpack.c.bf16 %v1334, %v1326
    %v1359 = vpack.c.bf16 %v1335, %v1327
    %v1360 = vpack.c.bf16 %v1344, %v1336
    %v1361 = vpack.c.bf16 %v1345, %v1337
    %v1362 = vpack.c.bf16 %v1346, %v1338
    %v1363 = vpack.c.bf16 %v1347, %v1339
    %v1364 = vpack.c.bf16 %v1348, %v1340
    %v1365 = vpack.c.bf16 %v1349, %v1341
    %v1366 = vpack.c.bf16 %v1350, %v1342
    %v1367 = vpack.c.bf16 %v1351, %v1343
    %v1368 = vld [vmem:[%s2 + $0xa0] sm:$0xff]
    %v1369 = vld [vmem:[%s2 + $0xa8] sm:$0xff]
    %v1370 = vld [vmem:[%s2 + $0xb0] sm:$0xff]
    %v1371 = vld [vmem:[%s2 + $0xb8] sm:$0xff]
    %1373 = vset.pattern.permute.xlu0 0
    %1374 = vperm.xlu0 %1373, %v1368
    %v1375 = vpop.permute.xlu0 %1374
    %1378 = vset.pattern.permute.xlu0 0
    %1379 = vperm.xlu0 %1378, %v1369
    %v1380 = vpop.permute.xlu0 %1379
    %1383 = vset.pattern.permute.xlu0 0
    %1384 = vperm.xlu0 %1383, %v1370
    %v1385 = vpop.permute.xlu0 %1384
    %1388 = vset.pattern.permute.xlu0 0
    %1389 = vperm.xlu0 %1388, %v1371
    %v1390 = vpop.permute.xlu0 %1389
    %v1396 = vunpack.c.l.b16 %v1316
    %v1397 = vunpack.c.l.b16 %v1317
    %v1398 = vunpack.c.l.b16 %v1318
    %v1399 = vunpack.c.l.b16 %v1319
    %v1400 = vpack.c.b16 %v1397, %v1396
    %v1401 = vpack.c.b16 %v1399, %v1398
    %v1403 = vsel %vm637, %v1400, 0
    %v1406 = vsel %vm637, %v1401, 0
    %1408 = vmatprep.subr.bf16.mxu0 %v1353
    %1409 = vmatpush1.bf16.msra.mxu0 %v1352
    %1410 = vmatprep.subr.bf16.mxu0 %v1361
    %1411 = vmatpush1.bf16.msra.mxu0 %v1360
    %1412 = vmatprep.subr.bf16.mxu0 0
    %1413 = vmatpush1.bf16.msra.mxu0 0
    %1414 = vmatprep.subr.bf16.mxu0 0
    %1415 = vmatpush1.bf16.msra.mxu0 0
    %1416 = vmatprep.subr.bf16.mxu0 0
    %1417 = vmatpush1.bf16.msra.mxu0 0
    %1418 = vmatprep.subr.bf16.mxu0 0
    %1419 = vmatpush1.bf16.msra.mxu0 0
    %1420 = vmatprep.subr.bf16.mxu0 0
    %1421 = vmatpush1.bf16.msra.mxu0 0
    %1422 = vmatprep.subr.bf16.mxu0 0
    %1423 = vmatpush1.bf16.msra.mxu0 0
    %1424 = vmatprep.subr.bf16.mxu0 0
    %1425 = vmatpush1.bf16.msra.mxu0 0
    %1426 = vmatprep.subr.bf16.mxu0 0
    %1427 = vmatpush1.bf16.msra.mxu0 0
    %1428 = vmatprep.subr.bf16.mxu0 0
    %1429 = vmatpush1.bf16.msra.mxu0 0
    %1430 = vmatprep.subr.bf16.mxu0 0
    %1431 = vmatpush1.bf16.msra.mxu0 0
    %1432 = vmatprep.subr.bf16.mxu0 0
    %1433 = vmatpush1.bf16.msra.mxu0 0
    %1434 = vmatprep.subr.bf16.mxu0 0
    %1435 = vmatpush1.bf16.msra.mxu0 0
    %1436 = vmatprep.subr.bf16.mxu0 0
    %1437 = vmatpush1.bf16.msra.mxu0 0
    %1438 = vmatprep.subr.bf16.mxu0 0
    %1439 = vmatpush1.bf16.msra.mxu0 0
    %1440 = vmatprep.mubr.bf16.mxu0 0
    %1441 = vmatmul.mubr.bf16.gmra.mrb[0].mxu0 %v1403
    %v1442 = vpop.f32.mrb[0].mxu0
    %v1443 = vadd.f32 %v1375, %v1442
    %v1444 = vpop.f32.mrb[0].mxu0
    %v1445 = vadd.f32 %v1375, %v1444
    %v1446 = vpop.f32.mrb[0].mxu0
    %v1447 = vadd.f32 %v1380, %v1446
    %v1448 = vpop.f32.mrb[0].mxu0
    %v1449 = vadd.f32 %v1380, %v1448
    %1450 = vmatprep.mubr.bf16.mxu0 0
    %1451 = vmatmul.mubr.bf16.gmra.mrb[0].mxu0 %v1406
    %v1452 = vpop.f32.mrb[0].mxu0
    %v1453 = vadd.f32 %v1385, %v1452
    %v1454 = vpop.f32.mrb[0].mxu0
    %v1455 = vadd.f32 %v1385, %v1454
    %v1456 = vpop.f32.mrb[0].mxu0
    %v1457 = vadd.f32 %v1390, %v1456
    %v1458 = vpop.f32.mrb[0].mxu0
    %v1459 = vadd.f32 %v1390, %v1458
    %1460 = vdwg.mxu0
    %1461 = vmatprep.subr.bf16.mxu0 %v1355
    %1462 = vmatpush1.bf16.msra.mxu0 %v1354
    %1463 = vmatprep.subr.bf16.mxu0 %v1363
    %1464 = vmatpush1.bf16.msra.mxu0 %v1362
    %1465 = vmatprep.subr.bf16.mxu0 0
    %1466 = vmatpush1.bf16.msra.mxu0 0
    %1467 = vmatprep.subr.bf16.mxu0 0
    %1468 = vmatpush1.bf16.msra.mxu0 0
    %1469 = vmatprep.subr.bf16.mxu0 0
    %1470 = vmatpush1.bf16.msra.mxu0 0
    %1471 = vmatprep.subr.bf16.mxu0 0
    %1472 = vmatpush1.bf16.msra.mxu0 0
    %1473 = vmatprep.subr.bf16.mxu0 0
    %1474 = vmatpush1.bf16.msra.mxu0 0
    %1475 = vmatprep.subr.bf16.mxu0 0
    %1476 = vmatpush1.bf16.msra.mxu0 0
    %1477 = vmatprep.subr.bf16.mxu0 0
    %1478 = vmatpush1.bf16.msra.mxu0 0
    %1479 = vmatprep.subr.bf16.mxu0 0
    %1480 = vmatpush1.bf16.msra.mxu0 0
    %1481 = vmatprep.subr.bf16.mxu0 0
    %1482 = vmatpush1.bf16.msra.mxu0 0
    %1483 = vmatprep.subr.bf16.mxu0 0
    %1484 = vmatpush1.bf16.msra.mxu0 0
    %1485 = vmatprep.subr.bf16.mxu0 0
    %1486 = vmatpush1.bf16.msra.mxu0 0
    %1487 = vmatprep.subr.bf16.mxu0 0
    %1488 = vmatpush1.bf16.msra.mxu0 0
    %1489 = vmatprep.subr.bf16.mxu0 0
    %1490 = vmatpush1.bf16.msra.mxu0 0
    %1491 = vmatprep.subr.bf16.mxu0 0
    %1492 = vmatpush1.bf16.msra.mxu0 0
    %1493 = vmatprep.mubr.bf16.mxu0 0
    %1494 = vmatmul.mubr.bf16.gmra.mrb[0].mxu0 %v1403
    %v1495 = vpop.f32.mrb[0].mxu0
    %v1496 = vadd.f32 %v1375, %v1495
    %v1497 = vpop.f32.mrb[0].mxu0
    %v1498 = vadd.f32 %v1375, %v1497
    %v1499 = vpop.f32.mrb[0].mxu0
    %v1500 = vadd.f32 %v1380, %v1499
    %v1501 = vpop.f32.mrb[0].mxu0
    %v1502 = vadd.f32 %v1380, %v1501
    %1503 = vmatprep.mubr.bf16.mxu0 0
    %1504 = vmatmul.mubr.bf16.gmra.mrb[0].mxu0 %v1406
    %v1505 = vpop.f32.mrb[0].mxu0
    %v1506 = vadd.f32 %v1385, %v1505
    %v1507 = vpop.f32.mrb[0].mxu0
    %v1508 = vadd.f32 %v1385, %v1507
    %v1509 = vpop.f32.mrb[0].mxu0
    %v1510 = vadd.f32 %v1390, %v1509
    %v1511 = vpop.f32.mrb[0].mxu0
    %v1512 = vadd.f32 %v1390, %v1511
    %1513 = vdwg.mxu0
    %1514 = vmatprep.subr.bf16.mxu0 %v1357
    %1515 = vmatpush1.bf16.msra.mxu0 %v1356
    %1516 = vmatprep.subr.bf16.mxu0 %v1365
    %1517 = vmatpush1.bf16.msra.mxu0 %v1364
    %1518 = vmatprep.subr.bf16.mxu0 0
    %1519 = vmatpush1.bf16.msra.mxu0 0
    %1520 = vmatprep.subr.bf16.mxu0 0
    %1521 = vmatpush1.bf16.msra.mxu0 0
    %1522 = vmatprep.subr.bf16.mxu0 0
    %1523 = vmatpush1.bf16.msra.mxu0 0
    %1524 = vmatprep.subr.bf16.mxu0 0
    %1525 = vmatpush1.bf16.msra.mxu0 0
    %1526 = vmatprep.subr.bf16.mxu0 0
    %1527 = vmatpush1.bf16.msra.mxu0 0
    %1528 = vmatprep.subr.bf16.mxu0 0
    %1529 = vmatpush1.bf16.msra.mxu0 0
    %1530 = vmatprep.subr.bf16.mxu0 0
    %1531 = vmatpush1.bf16.msra.mxu0 0
    %1532 = vmatprep.subr.bf16.mxu0 0
    %1533 = vmatpush1.bf16.msra.mxu0 0
    %1534 = vmatprep.subr.bf16.mxu0 0
    %1535 = vmatpush1.bf16.msra.mxu0 0
    %1536 = vmatprep.subr.bf16.mxu0 0
    %1537 = vmatpush1.bf16.msra.mxu0 0
    %1538 = vmatprep.subr.bf16.mxu0 0
    %1539 = vmatpush1.bf16.msra.mxu0 0
    %1540 = vmatprep.subr.bf16.mxu0 0
    %1541 = vmatpush1.bf16.msra.mxu0 0
    %1542 = vmatprep.subr.bf16.mxu0 0
    %1543 = vmatpush1.bf16.msra.mxu0 0
    %1544 = vmatprep.subr.bf16.mxu0 0
    %1545 = vmatpush1.bf16.msra.mxu0 0
    %1546 = vmatprep.mubr.bf16.mxu0 0
    %1547 = vmatmul.mubr.bf16.gmra.mrb[0].mxu0 %v1403
    %v1548 = vpop.f32.mrb[0].mxu0
    %v1549 = vadd.f32 %v1375, %v1548
    %v1550 = vpop.f32.mrb[0].mxu0
    %v1551 = vadd.f32 %v1375, %v1550
    %v1552 = vpop.f32.mrb[0].mxu0
    %v1553 = vadd.f32 %v1380, %v1552
    %v1554 = vpop.f32.mrb[0].mxu0
    %v1555 = vadd.f32 %v1380, %v1554
    %1556 = vmatprep.mubr.bf16.mxu0 0
    %1557 = vmatmul.mubr.bf16.gmra.mrb[0].mxu0 %v1406
    %v1558 = vpop.f32.mrb[0].mxu0
    %v1559 = vadd.f32 %v1385, %v1558
    %v1560 = vpop.f32.mrb[0].mxu0
    %v1561 = vadd.f32 %v1385, %v1560
    %v1562 = vpop.f32.mrb[0].mxu0
    %v1563 = vadd.f32 %v1390, %v1562
    %v1564 = vpop.f32.mrb[0].mxu0
    %v1565 = vadd.f32 %v1390, %v1564
    %1566 = vdwg.mxu0
    %1567 = vmatprep.subr.bf16.mxu0 %v1359
    %1568 = vmatpush1.bf16.msra.mxu0 %v1358
    %1569 = vmatprep.subr.bf16.mxu0 %v1367
    %1570 = vmatpush1.bf16.msra.mxu0 %v1366
    %1571 = vmatprep.subr.bf16.mxu0 0
    %1572 = vmatpush1.bf16.msra.mxu0 0
    %1573 = vmatprep.subr.bf16.mxu0 0
    %1574 = vmatpush1.bf16.msra.mxu0 0
    %1575 = vmatprep.subr.bf16.mxu0 0
    %1576 = vmatpush1.bf16.msra.mxu0 0
    %1577 = vmatprep.subr.bf16.mxu0 0
    %1578 = vmatpush1.bf16.msra.mxu0 0
    %1579 = vmatprep.subr.bf16.mxu0 0
    %1580 = vmatpush1.bf16.msra.mxu0 0
    %1581 = vmatprep.subr.bf16.mxu0 0
    %1582 = vmatpush1.bf16.msra.mxu0 0
    %1583 = vmatprep.subr.bf16.mxu0 0
    %1584 = vmatpush1.bf16.msra.mxu0 0
    %1585 = vmatprep.subr.bf16.mxu0 0
    %1586 = vmatpush1.bf16.msra.mxu0 0
    %1587 = vmatprep.subr.bf16.mxu0 0
    %1588 = vmatpush1.bf16.msra.mxu0 0
    %1589 = vmatprep.subr.bf16.mxu0 0
    %1590 = vmatpush1.bf16.msra.mxu0 0
    %1591 = vmatprep.subr.bf16.mxu0 0
    %1592 = vmatpush1.bf16.msra.mxu0 0
    %1593 = vmatprep.subr.bf16.mxu0 0
    %1594 = vmatpush1.bf16.msra.mxu0 0
    %1595 = vmatprep.subr.bf16.mxu0 0
    %1596 = vmatpush1.bf16.msra.mxu0 0
    %1597 = vmatprep.subr.bf16.mxu0 0
    %1598 = vmatpush1.bf16.msra.mxu0 0
    %1599 = vmatprep.mubr.bf16.mxu0 0
    %1600 = vmatmul.mubr.bf16.gmra.mrb[0].mxu0 %v1403
    %v1601 = vpop.f32.mrb[0].mxu0
    %v1602 = vadd.f32 %v1375, %v1601
    %v1603 = vpop.f32.mrb[0].mxu0
    %v1604 = vadd.f32 %v1375, %v1603
    %v1605 = vpop.f32.mrb[0].mxu0
    %v1606 = vadd.f32 %v1380, %v1605
    %v1607 = vpop.f32.mrb[0].mxu0
    %v1608 = vadd.f32 %v1380, %v1607
    %1609 = vmatprep.mubr.bf16.mxu0 0
    %1610 = vmatmul.mubr.bf16.gmra.mrb[0].mxu0 %v1406
    %v1611 = vpop.f32.mrb[0].mxu0
    %v1612 = vadd.f32 %v1385, %v1611
    %v1613 = vpop.f32.mrb[0].mxu0
    %v1614 = vadd.f32 %v1385, %v1613
    %v1615 = vpop.f32.mrb[0].mxu0
    %v1616 = vadd.f32 %v1390, %v1615
    %v1617 = vpop.f32.mrb[0].mxu0
    %v1618 = vadd.f32 %v1390, %v1617
    %1619 = vdwg.mxu0
    %v1620 = vadd.f32 %v1059, %v1443
    %v1621 = vadd.f32 %v1061, %v1445
    %v1622 = vadd.f32 %v1132, %v1496
    %v1623 = vadd.f32 %v1134, %v1498
    %v1624 = vadd.f32 %v1205, %v1549
    %v1625 = vadd.f32 %v1207, %v1551
    %v1626 = vadd.f32 %v1278, %v1602
    %v1627 = vadd.f32 %v1280, %v1604
    %v1628 = vadd.f32 %v1063, %v1447
    %v1629 = vadd.f32 %v1065, %v1449
    %v1630 = vadd.f32 %v1136, %v1500
    %v1631 = vadd.f32 %v1138, %v1502
    %v1632 = vadd.f32 %v1209, %v1553
    %v1633 = vadd.f32 %v1211, %v1555
    %v1634 = vadd.f32 %v1282, %v1606
    %v1635 = vadd.f32 %v1284, %v1608
    %v1636 = vadd.f32 %v1069, %v1453
    %v1637 = vadd.f32 %v1071, %v1455
    %v1638 = vadd.f32 %v1142, %v1506
    %v1639 = vadd.f32 %v1144, %v1508
    %v1640 = vadd.f32 %v1215, %v1559
    %v1641 = vadd.f32 %v1217, %v1561
    %v1642 = vadd.f32 %v1288, %v1612
    %v1643 = vadd.f32 %v1290, %v1614
    %v1644 = vadd.f32 %v1073, %v1457
    %v1645 = vadd.f32 %v1075, %v1459
    %v1646 = vadd.f32 %v1146, %v1510
    %v1647 = vadd.f32 %v1148, %v1512
    %v1648 = vadd.f32 %v1219, %v1563
    %v1649 = vadd.f32 %v1221, %v1565
    %v1650 = vadd.f32 %v1292, %v1616
    %v1651 = vadd.f32 %v1294, %v1618
    %v1652 = vtanh.pop %v1620
    %v1653 = vtanh.pop %v1621
    %v1654 = vtanh.pop %v1622
    %v1655 = vtanh.pop %v1623
    %v1656 = vtanh.pop %v1624
    %v1657 = vtanh.pop %v1625
    %v1658 = vtanh.pop %v1626
    %v1659 = vtanh.pop %v1627
    %v1660 = vtanh.pop %v1628
    %v1661 = vtanh.pop %v1629
    %v1662 = vtanh.pop %v1630
    %v1663 = vtanh.pop %v1631
    %v1664 = vtanh.pop %v1632
    %v1665 = vtanh.pop %v1633
    %v1666 = vtanh.pop %v1634
    %v1667 = vtanh.pop %v1635
    %v1668 = vtanh.pop %v1636
    %v1669 = vtanh.pop %v1637
    %v1670 = vtanh.pop %v1638
    %v1671 = vtanh.pop %v1639
    %v1672 = vtanh.pop %v1640
    %v1673 = vtanh.pop %v1641
    %v1674 = vtanh.pop %v1642
    %v1675 = vtanh.pop %v1643
    %v1676 = vtanh.pop %v1644
    %v1677 = vtanh.pop %v1645
    %v1678 = vtanh.pop %v1646
    %v1679 = vtanh.pop %v1647
    %v1680 = vtanh.pop %v1648
    %v1681 = vtanh.pop %v1649
    %v1682 = vtanh.pop %v1650
    %v1683 = vtanh.pop %v1651
    %v1684 = vld [vmem:[%s3 + $0x40] sm:$0xf]
    %v1685 = vpack.c.bf16 %v1660, %v1652
    %v1686 = vpack.c.bf16 %v1661, %v1653
    %v1687 = vpack.c.bf16 %v1662, %v1654
    %v1688 = vpack.c.bf16 %v1663, %v1655
    %v1689 = vpack.c.bf16 %v1664, %v1656
    %v1690 = vpack.c.bf16 %v1665, %v1657
    %v1691 = vpack.c.bf16 %v1666, %v1658
    %v1692 = vpack.c.bf16 %v1667, %v1659
    %v1693 = vpack.c.bf16 %v1676, %v1668
    %v1694 = vpack.c.bf16 %v1677, %v1669
    %v1695 = vpack.c.bf16 %v1678, %v1670
    %v1696 = vpack.c.bf16 %v1679, %v1671
    %v1697 = vpack.c.bf16 %v1680, %v1672
    %v1698 = vpack.c.bf16 %v1681, %v1673
    %v1699 = vpack.c.bf16 %v1682, %v1674
    %v1700 = vpack.c.bf16 %v1683, %v1675
    %v1702 = vsel %vm637, %v1684, 0
    %1704 = vmatprep.subr.bf16.mxu0 %v1686
    %1705 = vmatpush1.bf16.msra.mxu0 %v1685
    %1706 = vmatprep.subr.bf16.mxu0 %v1694
    %1707 = vmatpush1.bf16.msra.mxu0 %v1693
    %1708 = vmatprep.subr.bf16.mxu0 0
    %1709 = vmatpush1.bf16.msra.mxu0 0
    %1710 = vmatprep.subr.bf16.mxu0 0
    %1711 = vmatpush1.bf16.msra.mxu0 0
    %1712 = vmatprep.subr.bf16.mxu0 0
    %1713 = vmatpush1.bf16.msra.mxu0 0
    %1714 = vmatprep.subr.bf16.mxu0 0
    %1715 = vmatpush1.bf16.msra.mxu0 0
    %1716 = vmatprep.subr.bf16.mxu0 0
    %1717 = vmatpush1.bf16.msra.mxu0 0
    %1718 = vmatprep.subr.bf16.mxu0 0
    %1719 = vmatpush1.bf16.msra.mxu0 0
    %1720 = vmatprep.subr.bf16.mxu0 0
    %1721 = vmatpush1.bf16.msra.mxu0 0
    %1722 = vmatprep.subr.bf16.mxu0 0
    %1723 = vmatpush1.bf16.msra.mxu0 0
    %1724 = vmatprep.subr.bf16.mxu0 0
    %1725 = vmatpush1.bf16.msra.mxu0 0
    %1726 = vmatprep.subr.bf16.mxu0 0
    %1727 = vmatpush1.bf16.msra.mxu0 0
    %1728 = vmatprep.subr.bf16.mxu0 0
    %1729 = vmatpush1.bf16.msra.mxu0 0
    %1730 = vmatprep.subr.bf16.mxu0 0
    %1731 = vmatpush1.bf16.msra.mxu0 0
    %1732 = vmatprep.subr.bf16.mxu0 0
    %1733 = vmatpush1.bf16.msra.mxu0 0
    %1734 = vmatprep.subr.bf16.mxu0 0
    %1735 = vmatpush1.bf16.msra.mxu0 0
    %1736 = vmatprep.mubr.bf16.mxu0 0
    %1737 = vmatmul.mubr.bf16.gmra.mrb[0].mxu0 %v1702
    %v1738 = vpop.f32.mrb[0].mxu0
    %v1739 = vadd.f32 0.0, %v1738
    %v1740 = vpop.f32.mrb[0].mxu0
    %v1741 = vadd.f32 0.0, %v1740
    %v1742 = vpop.f32.mrb[0].mxu0
    %v1743 = vpop.f32.mrb[0].mxu0
    %1744 = vdwg.mxu0
    %1745 = vmatprep.subr.bf16.mxu0 %v1688
    %1746 = vmatpush1.bf16.msra.mxu0 %v1687
    %1747 = vmatprep.subr.bf16.mxu0 %v1696
    %1748 = vmatpush1.bf16.msra.mxu0 %v1695
    %1749 = vmatprep.subr.bf16.mxu0 0
    %1750 = vmatpush1.bf16.msra.mxu0 0
    %1751 = vmatprep.subr.bf16.mxu0 0
    %1752 = vmatpush1.bf16.msra.mxu0 0
    %1753 = vmatprep.subr.bf16.mxu0 0
    %1754 = vmatpush1.bf16.msra.mxu0 0
    %1755 = vmatprep.subr.bf16.mxu0 0
    %1756 = vmatpush1.bf16.msra.mxu0 0
    %1757 = vmatprep.subr.bf16.mxu0 0
    %1758 = vmatpush1.bf16.msra.mxu0 0
    %1759 = vmatprep.subr.bf16.mxu0 0
    %1760 = vmatpush1.bf16.msra.mxu0 0
    %1761 = vmatprep.subr.bf16.mxu0 0
    %1762 = vmatpush1.bf16.msra.mxu0 0
    %1763 = vmatprep.subr.bf16.mxu0 0
    %1764 = vmatpush1.bf16.msra.mxu0 0
    %1765 = vmatprep.subr.bf16.mxu0 0
    %1766 = vmatpush1.bf16.msra.mxu0 0
    %1767 = vmatprep.subr.bf16.mxu0 0
    %1768 = vmatpush1.bf16.msra.mxu0 0
    %1769 = vmatprep.subr.bf16.mxu0 0
    %1770 = vmatpush1.bf16.msra.mxu0 0
    %1771 = vmatprep.subr.bf16.mxu0 0
    %1772 = vmatpush1.bf16.msra.mxu0 0
    %1773 = vmatprep.subr.bf16.mxu0 0
    %1774 = vmatpush1.bf16.msra.mxu0 0
    %1775 = vmatprep.subr.bf16.mxu0 0
    %1776 = vmatpush1.bf16.msra.mxu0 0
    %1777 = vmatprep.mubr.bf16.mxu0 0
    %1778 = vmatmul.mubr.bf16.gmra.mrb[0].mxu0 %v1702
    %v1779 = vpop.f32.mrb[0].mxu0
    %v1780 = vadd.f32 0.0, %v1779
    %v1781 = vpop.f32.mrb[0].mxu0
    %v1782 = vadd.f32 0.0, %v1781
    %v1783 = vpop.f32.mrb[0].mxu0
    %v1784 = vpop.f32.mrb[0].mxu0
    %1785 = vdwg.mxu0
    %1786 = vmatprep.subr.bf16.mxu0 %v1690
    %1787 = vmatpush1.bf16.msra.mxu0 %v1689
    %1788 = vmatprep.subr.bf16.mxu0 %v1698
    %1789 = vmatpush1.bf16.msra.mxu0 %v1697
    %1790 = vmatprep.subr.bf16.mxu0 0
    %1791 = vmatpush1.bf16.msra.mxu0 0
    %1792 = vmatprep.subr.bf16.mxu0 0
    %1793 = vmatpush1.bf16.msra.mxu0 0
    %1794 = vmatprep.subr.bf16.mxu0 0
    %1795 = vmatpush1.bf16.msra.mxu0 0
    %1796 = vmatprep.subr.bf16.mxu0 0
    %1797 = vmatpush1.bf16.msra.mxu0 0
    %1798 = vmatprep.subr.bf16.mxu0 0
    %1799 = vmatpush1.bf16.msra.mxu0 0
    %1800 = vmatprep.subr.bf16.mxu0 0
    %1801 = vmatpush1.bf16.msra.mxu0 0
    %1802 = vmatprep.subr.bf16.mxu0 0
    %1803 = vmatpush1.bf16.msra.mxu0 0
    %1804 = vmatprep.subr.bf16.mxu0 0
    %1805 = vmatpush1.bf16.msra.mxu0 0
    %1806 = vmatprep.subr.bf16.mxu0 0
    %1807 = vmatpush1.bf16.msra.mxu0 0
    %1808 = vmatprep.subr.bf16.mxu0 0
    %1809 = vmatpush1.bf16.msra.mxu0 0
    %1810 = vmatprep.subr.bf16.mxu0 0
    %1811 = vmatpush1.bf16.msra.mxu0 0
    %1812 = vmatprep.subr.bf16.mxu0 0
    %1813 = vmatpush1.bf16.msra.mxu0 0
    %1814 = vmatprep.subr.bf16.mxu0 0
    %1815 = vmatpush1.bf16.msra.mxu0 0
    %1816 = vmatprep.subr.bf16.mxu0 0
    %1817 = vmatpush1.bf16.msra.mxu0 0
    %1818 = vmatprep.mubr.bf16.mxu0 0
    %1819 = vmatmul.mubr.bf16.gmra.mrb[0].mxu0 %v1702
    %v1820 = vpop.f32.mrb[0].mxu0
    %v1821 = vadd.f32 0.0, %v1820
    %v1822 = vpop.f32.mrb[0].mxu0
    %v1823 = vadd.f32 0.0, %v1822
    %v1824 = vpop.f32.mrb[0].mxu0
    %v1825 = vpop.f32.mrb[0].mxu0
    %1826 = vdwg.mxu0
    %1827 = vmatprep.subr.bf16.mxu0 %v1692
    %1828 = vmatpush1.bf16.msra.mxu0 %v1691
    %1829 = vmatprep.subr.bf16.mxu0 %v1700
    %1830 = vmatpush1.bf16.msra.mxu0 %v1699
    %1831 = vmatprep.subr.bf16.mxu0 0
    %1832 = vmatpush1.bf16.msra.mxu0 0
    %1833 = vmatprep.subr.bf16.mxu0 0
    %1834 = vmatpush1.bf16.msra.mxu0 0
    %1835 = vmatprep.subr.bf16.mxu0 0
    %1836 = vmatpush1.bf16.msra.mxu0 0
    %1837 = vmatprep.subr.bf16.mxu0 0
    %1838 = vmatpush1.bf16.msra.mxu0 0
    %1839 = vmatprep.subr.bf16.mxu0 0
    %1840 = vmatpush1.bf16.msra.mxu0 0
    %1841 = vmatprep.subr.bf16.mxu0 0
    %1842 = vmatpush1.bf16.msra.mxu0 0
    %1843 = vmatprep.subr.bf16.mxu0 0
    %1844 = vmatpush1.bf16.msra.mxu0 0
    %1845 = vmatprep.subr.bf16.mxu0 0
    %1846 = vmatpush1.bf16.msra.mxu0 0
    %1847 = vmatprep.subr.bf16.mxu0 0
    %1848 = vmatpush1.bf16.msra.mxu0 0
    %1849 = vmatprep.subr.bf16.mxu0 0
    %1850 = vmatpush1.bf16.msra.mxu0 0
    %1851 = vmatprep.subr.bf16.mxu0 0
    %1852 = vmatpush1.bf16.msra.mxu0 0
    %1853 = vmatprep.subr.bf16.mxu0 0
    %1854 = vmatpush1.bf16.msra.mxu0 0
    %1855 = vmatprep.subr.bf16.mxu0 0
    %1856 = vmatpush1.bf16.msra.mxu0 0
    %1857 = vmatprep.subr.bf16.mxu0 0
    %1858 = vmatpush1.bf16.msra.mxu0 0
    %1859 = vmatprep.mubr.bf16.mxu0 0
    %1860 = vmatmul.mubr.bf16.gmra.mrb[0].mxu0 %v1702
    %v1861 = vpop.f32.mrb[0].mxu0
    %v1862 = vadd.f32 0.0, %v1861
    %v1863 = vpop.f32.mrb[0].mxu0
    %v1864 = vadd.f32 0.0, %v1863
    %v1865 = vpop.f32.mrb[0].mxu0
    %v1866 = vpop.f32.mrb[0].mxu0
    %1867 = vdwg.mxu0
    %v1868 = vld [vmem:[%s2 + $0xc0] sm:$0x1]
    %1870 = vset.pattern.permute.xlu0 0
    %1871 = vperm.xlu0 %1870, %v1868
    %v1872 = vpop.permute.xlu0 %1871
    %v1874 = vadd.f32 %v1739, %v1872
    %v1875 = vadd.f32 %v1741, %v1872
    %v1876 = vadd.f32 %v1780, %v1872
    %v1877 = vadd.f32 %v1782, %v1872
    %v1878 = vadd.f32 %v1821, %v1872
    %v1879 = vadd.f32 %v1823, %v1872
    %v1880 = vadd.f32 %v1862, %v1872
    %v1881 = vadd.f32 %v1864, %v1872
    %v1882 = vtanh.pop %v1874
    %v1883 = vtanh.pop %v1875
    %v1884 = vtanh.pop %v1876
    %v1885 = vtanh.pop %v1877
    %v1886 = vtanh.pop %v1878
    %v1887 = vtanh.pop %v1879
    %v1888 = vtanh.pop %v1880
    %v1889 = vtanh.pop %v1881
    %v1890 = vadd.f32 %v1882, 1.0
    %v1891 = vadd.f32 %v1883, 1.0
    %v1892 = vadd.f32 %v1884, 1.0
    %v1893 = vadd.f32 %v1885, 1.0
    %v1894 = vadd.f32 %v1886, 1.0
    %v1895 = vadd.f32 %v1887, 1.0
    %v1896 = vadd.f32 %v1888, 1.0
    %v1897 = vadd.f32 %v1889, 1.0
    %v1898 = vmul.f32 %v1890, 0.5
    %v1899 = vmul.f32 %v1891, 0.5
    %v1900 = vmul.f32 %v1892, 0.5
    %v1901 = vmul.f32 %v1893, 0.5
    %v1902 = vmul.f32 %v1894, 0.5
    %v1903 = vmul.f32 %v1895, 0.5
    %v1904 = vmul.f32 %v1896, 0.5
    %v1905 = vmul.f32 %v1897, 0.5
    %v1914 = vcombine.low %v1898, %v1899
    %v1915 = vcombine.low %v1900, %v1901
    %v1916 = vcombine.low %v1902, %v1903
    %v1917 = vcombine.low %v1904, %v1905
    %v1919 = vunpack.c.l.s4 1966171168
    %v1920 = vunpack.c.0.s8 %v1919
    %v1921 = vlaneseq
    %v1922 = vshrl.u32 %v1921, 7
    %v1923 = vsub.s32 %v1920, %v1922
    %v1924 = vrot.slane %v1914, %v1923
    %v1926 = vunpack.c.l.s4 1966171168
    %v1927 = vunpack.c.0.s8 %v1926
    %v1928 = vlaneseq
    %v1929 = vshrl.u32 %v1928, 7
    %v1930 = vsub.s32 %v1927, %v1929
    %v1931 = vrot.slane %v1915, %v1930
    %v1933 = vunpack.c.l.s4 1966171168
    %v1934 = vunpack.c.0.s8 %v1933
    %v1935 = vlaneseq
    %v1936 = vshrl.u32 %v1935, 7
    %v1937 = vsub.s32 %v1934, %v1936
    %v1938 = vrot.slane %v1916, %v1937
    %v1940 = vunpack.c.l.s4 1966171168
    %v1941 = vunpack.c.0.s8 %v1940
    %v1942 = vlaneseq
    %v1943 = vshrl.u32 %v1942, 7
    %v1944 = vsub.s32 %v1941, %v1943
    %v1945 = vrot.slane %v1917, %v1944
    %v1946 = vcombine.low %v1924, %v1931
    %v1947 = vcombine.low %v1938, %v1945
    %v1949 = vunpack.c.l.s4 1966171168
    %v1950 = vunpack.c.0.s8 %v1949
    %v1951 = vlaneseq
    %v1952 = vshrl.u32 %v1951, 7
    %v1953 = vsub.s32 %v1950, %v1952
    %v1954 = vrot.slane %v1946, %v1953
    %v1956 = vunpack.c.l.s4 1966171168
    %v1957 = vunpack.c.0.s8 %v1956
    %v1958 = vlaneseq
    %v1959 = vshrl.u32 %v1958, 7
    %v1960 = vsub.s32 %v1957, %v1959
    %v1961 = vrot.slane %v1947, %v1960
    %v1962 = vcombine.low %v1954, %v1961
    %1964 = vst [vmem:[#allocation2] sm:$0xff] %v1962
    // Predicated region
    $region18: #{ann_forward_pallas_fm.1} parent=1 // pred_check
      _
    $region19: #{ann_forward_pallas_fm.1} parent=1 // pred_check_branch
      %1966 = sbr.rel (0) target = $region21
    $region20: #{ann_forward_pallas_fm.1} parent=1 // pred_region
      %s1968 = ssub.s32 128, 128
      %1969 = vsyncadd [#allocation3], %s1968
      %s1971 = sshll.u32 [#allocation2], 4
      %s1972 = int_to_ptr.vmem [resolvable:$true] %s1971
      %1974 = dma.vmem_to_hbm [thread:$0]  %s1972, 128, %s4, [#allocation3]
    $region21: #{ann_forward_pallas_fm.1} parent=1 // pred_fallthru
      _
    // Predicated region
    $region22: #{ann_forward_pallas_fm.1} parent=1 // pred_check
      _
    $region23: #{ann_forward_pallas_fm.1} parent=1 // pred_check_branch
      %1976 = sbr.rel (0) target = $region25
    $region24: #{ann_forward_pallas_fm.1} parent=1 // pred_region
      %1977 = dma.done [#allocation3], 128
    $region25: #{ann_forward_pallas_fm.1} parent=1 // pred_fallthru
      _
    %1978 = vsyncpa [#allocation3], 1

</llo_original>
